<compile_context>
chip_gen: v7x
topology: tpu7x:2x2x1
jax: 0.10.0
libtpu: 0.0.40
codegen_flags: <defaults>
</compile_context>

<pallas_src>
import math
import jax
import jax.numpy as jnp
from jax.experimental import pallas as pl
from jax.experimental.pallas import tpu as pltpu


# ----------------------------------------------------------------------------
# Helpers
# ----------------------------------------------------------------------------
def _layernorm(h, w, b, eps=1e-5):
    mu = jnp.mean(h, axis=-1, keepdims=True)
    var = jnp.mean(jnp.square(h - mu), axis=-1, keepdims=True)
    return (h - mu) * jax.lax.rsqrt(var + eps) * w + b


# ----------------------------------------------------------------------------
# Pallas kernel: one grid step == one RWKV block (layer).
# ----------------------------------------------------------------------------
def rwkv_layer_kernel(x_ref, vecs_ref, w1_ref, w2_ref, st_ref,
                      xout_ref, nst_ref):
    i = pl.program_id(0)
    H = x_ref.shape[-1]
    F = w2_ref.shape[1]

    def bdot(lhs_f32, w_bf16):
        # bf16 x bf16 MXU matmul with f32 accumulation.
        return jnp.dot(lhs_f32.astype(jnp.bfloat16), w_bf16,
                       preferred_element_type=jnp.float32)

    # Layer 0 seeds the resident residual-stream accumulator (ln0 already
    # applied in the wrapper).
    @pl.when(i == 0)
    def _():
        xout_ref[...] = x_ref[...]

    x = xout_ref[...]

    # Packed per-layer vector params: (16, H) f32.
    vecs = vecs_ref[0]
    ln1w, ln1b = vecs[0:1], vecs[1:2]
    ln2w, ln2b = vecs[2:3], vecs[3:4]
    td, tf = vecs[4:5], vecs[5:6]
    tmk, tmv, tmr = vecs[6:7], vecs[7:8], vecs[8:9]
    ftmk, ftmr = vecs[9:10], vecs[10:11]

    # Packed states: (5, 1, B, H) f32.
    st_A = st_ref[0, 0]
    st_B = st_ref[1, 0]
    st_p = st_ref[2, 0]
    st_x = st_ref[3, 0]
    st_ffn = st_ref[4, 0]

    # Static column offsets into the merged (H, 5H+F) weight slab.
    O_WK, O_WV, O_WR, O_WO = 0 * H, 1 * H, 2 * H, 3 * H
    O_FK, O_FR = 4 * H, 4 * H + F

    # ----------------------- RWKV_TimeMix (attention) ------------------------
    h = _layernorm(x, ln1w, ln1b)
    xk = h * tmk + st_x * (1.0 - tmk)
    xv = h * tmv + st_x * (1.0 - tmv)
    xr = h * tmr + st_x * (1.0 - tmr)

    k = bdot(xk, w1_ref[0, :, O_WK:O_WK + H])
    v = bdot(xv, w1_ref[0, :, O_WV:O_WV + H])
    r = jax.nn.sigmoid(bdot(xr, w1_ref[0, :, O_WR:O_WR + H]))

    ww = tf + k
    p = jnp.maximum(st_p, ww)               # torch stack/max == elementwise max
    e1 = jnp.exp(st_p - p)
    e2 = jnp.exp(ww - p)
    a = e1 * st_A + e2 * v
    b = e1 * st_B + e2

    ww2 = st_p - jnp.exp(td)
    p2 = jnp.maximum(ww2, k)
    e1b = jnp.exp(ww2 - p2)
    e2b = jnp.exp(k - p2)

    rwkv = r * a / b
    x = x + bdot(rwkv, w1_ref[0, :, O_WO:O_WO + H])

    # --------------------------- RWKV_ChannelMix -----------------------------
    h2 = _layernorm(x, ln2w, ln2b)
    fxk = h2 * ftmk + st_ffn * (1.0 - ftmk)
    fxr = h2 * ftmr + st_ffn * (1.0 - ftmr)

    fr = jax.nn.sigmoid(bdot(fxr, w1_ref[0, :, O_FR:O_FR + H]))
    fk = jnp.square(jnp.maximum(bdot(fxk, w1_ref[0, :, O_FK:O_FK + F]), 0.0))
    x = x + fr * bdot(fk, w2_ref[0])

    # carry residual stream to the next layer (resident output block)
    xout_ref[...] = x

    # per-layer new states, written as one (5, 1, B, H) block
    nst_ref[0, 0] = e1b * st_A + e2b * v
    nst_ref[1, 0] = e1b * st_B + e2b
    nst_ref[2, 0] = p2
    nst_ref[3, 0] = h
    nst_ref[4, 0] = h2


# ----------------------------------------------------------------------------
# Head kernel: logits = ln_out(x) @ W_head, tiled over the vocab dimension.
# ----------------------------------------------------------------------------
def head_kernel(x_ref, w_ref, o_ref):
    o_ref[...] = jnp.dot(x_ref[...].astype(jnp.bfloat16), w_ref[...],
                         preferred_element_type=jnp.float32)


# ----------------------------------------------------------------------------
# Wrapper
# ----------------------------------------------------------------------------
def rwkv_v4_forward(x, hidden_state, packed):
    """x: (B, H) f32, hidden_state: (5, L, B, H) f32, packed: see pack_params."""
    B, H = x.shape
    vecs = packed["vecs"]        # (L, 16, H)    f32
    w1 = packed["w1"]            # (L, H, 5H+F)  bf16
    w2 = packed["w2"]            # (L, F, H)     bf16
    headw = packed["head_w"]     # (H, V)        bf16
    L = vecs.shape[0]
    F = w2.shape[1]
    V = headw.shape[1]

    # ln0 (layer-0 input LayerNorm) — tiny elementwise op, done once here.
    x0 = _layernorm(x, packed["ln0_w"], packed["ln0_b"])

    # Explicit VMEM budget: ~3x the per-layer block footprint (2-deep weight
    # pipeline + headroom), clamped to be valid on v7x (64 MiB physical) and
    # never below the v5e scoped default.
    weight_block_bytes = (H * (5 * H + F) + F * H) * 2               # bf16
    misc_bytes = (16 * H + 2 * 5 * B * H + 2 * B * H) * 4            # f32
    vmem_limit = int(min(60 << 20,
                         max(16 << 20, 3 * (weight_block_bytes + misc_bytes))))

    layer_fn = pl.pallas_call(
        rwkv_layer_kernel,
        out_shape=(jax.ShapeDtypeStruct((B, H), jnp.float32),
                   jax.ShapeDtypeStruct((5, L, B, H), jnp.float32)),
        grid_spec=pltpu.PrefetchScalarGridSpec(
            num_scalar_prefetch=0,
            grid=(L,),
            in_specs=[
                pl.BlockSpec((B, H), lambda i: (0, 0)),              # x (post-ln0)
                pl.BlockSpec((1, 16, H), lambda i: (i, 0, 0)),       # vec params
                pl.BlockSpec((1, H, 5 * H + F), lambda i: (i, 0, 0)),  # weights 1
                pl.BlockSpec((1, F, H), lambda i: (i, 0, 0)),        # ffn Wv
                pl.BlockSpec((5, 1, B, H), lambda i: (0, i, 0, 0)),  # states in
            ],
            out_specs=[
                pl.BlockSpec((B, H), lambda i: (0, 0)),              # residual out
                pl.BlockSpec((5, 1, B, H), lambda i: (0, i, 0, 0)),  # states out
            ],
        ),
        compiler_params=pltpu.CompilerParams(
            dimension_semantics=("arbitrary",),
            vmem_limit_bytes=vmem_limit),
    )
    x_final, new_hidden = layer_fn(x0, vecs, w1, w2, hidden_state)

    # ln_out outside the layer loop (tiny), then head tiled over V so the
    # (H, V) weight never has to be resident across the whole layer grid.
    xo = _layernorm(x_final, packed["ln_out_w"], packed["ln_out_b"])
    tn = 256 if V % 256 == 0 else (128 if V % 128 == 0 else V)
    head_fn = pl.pallas_call(
        head_kernel,
        out_shape=jax.ShapeDtypeStruct((B, V), jnp.float32),
        grid_spec=pltpu.PrefetchScalarGridSpec(
            num_scalar_prefetch=0,
            grid=(V // tn,),
            in_specs=[pl.BlockSpec((B, H), lambda j: (0, 0)),
                      pl.BlockSpec((H, tn), lambda j: (0, j))],
            out_specs=pl.BlockSpec((B, tn), lambda j: (0, j)),
        ),
        compiler_params=pltpu.CompilerParams(
            dimension_semantics=("parallel",),
            vmem_limit_bytes=32 << 20),
    )
    logits = head_fn(xo, headw)
    return logits, new_hidden


# ----------------------------------------------------------------------------
# Parameter construction & packing
# ----------------------------------------------------------------------------
def make_params(key, L, H, F, V):
    keys = jax.random.split(key, 16)
    kit = iter(keys)

    def lin(k, fan_in, shape):  # torch Linear default: U(-1/sqrt(in), 1/sqrt(in))
        bound = 1.0 / math.sqrt(fan_in)
        return jax.random.uniform(k, shape, jnp.float32, -bound, bound)

    def mix(k, shape):  # time-mix coefficients in (0, 1)
        return jax.random.uniform(k, shape, jnp.float32, 0.1, 0.9)

    return {
        "ln0_w": jnp.ones((H,), jnp.float32),
        "ln0_b": jnp.zeros((H,), jnp.float32),
        "ln_out_w": jnp.ones((H,), jnp.float32),
        "ln_out_b": jnp.zeros((H,), jnp.float32),
        "head_w": lin(next(kit), H, (H, V)),
        "ln1_w": jnp.ones((L, H), jnp.float32),
        "ln1_b": jnp.zeros((L, H), jnp.float32),
        "ln2_w": jnp.ones((L, H), jnp.float32),
        "ln2_b": jnp.zeros((L, H), jnp.float32),
        "att_td": 0.1 * jax.random.normal(next(kit), (L, H), jnp.float32),
        "att_tf": jnp.full((L, H), math.log(0.3), jnp.float32),
        "att_tmk": mix(next(kit), (L, H)),
        "att_tmv": mix(next(kit), (L, H)),
        "att_tmr": mix(next(kit), (L, H)),
        "att_wk": lin(next(kit), H, (L, H, H)),
        "att_wv": lin(next(kit), H, (L, H, H)),
        "att_wr": lin(next(kit), H, (L, H, H)),
        "att_wo": lin(next(kit), H, (L, H, H)),
        "ffn_tmk": mix(next(kit), (L, H)),
        "ffn_tmr": mix(next(kit), (L, H)),
        "ffn_wk": lin(next(kit), H, (L, H, F)),
        "ffn_wr": lin(next(kit), H, (L, H, H)),
        "ffn_wv": lin(next(kit), F, (L, F, H)),
    }


def pack_params(raw):
    L, H = raw["ln1_w"].shape
    zeros = jnp.zeros((L, H), jnp.float32)
    vec_rows = [raw["ln1_w"], raw["ln1_b"], raw["ln2_w"], raw["ln2_b"],
                raw["att_td"], raw["att_tf"],
                raw["att_tmk"], raw["att_tmv"], raw["att_tmr"],
                raw["ffn_tmk"], raw["ffn_tmr"]] + [zeros] * 5
    vecs = jnp.stack(vec_rows, axis=1)                                 # (L,16,H)
    # Merged per-layer weight slab (all weights with H input rows):
    #   [att Wk | att Wv | att Wr | att Wo | ffn Wk | ffn Wr]  -> (L, H, 5H+F)
    w1 = jnp.concatenate([raw["att_wk"], raw["att_wv"], raw["att_wr"],
                          raw["att_wo"], raw["ffn_wk"], raw["ffn_wr"]],
                         axis=-1).astype(jnp.bfloat16)
    w2 = raw["ffn_wv"].astype(jnp.bfloat16)                            # (L,F,H)
    head_w = raw["head_w"].astype(jnp.bfloat16)                        # (H,V)
    return {"vecs": vecs, "w1": w1, "w2": w2, "head_w": head_w,
            "ln0_w": raw["ln0_w"], "ln0_b": raw["ln0_b"],
            "ln_out_w": raw["ln_out_w"], "ln_out_b": raw["ln_out_b"]}


# ----------------------------------------------------------------------------
# Pure-JAX reference (mirrors PyTorch forward; matmuls use the same bf16
# weights / bf16 LHS with f32 accumulation as the kernel).
# ----------------------------------------------------------------------------
def rwkv_v4_reference(x, hidden_state, raw):
    def bdot(a, w):
        return jnp.dot(a.astype(jnp.bfloat16), w.astype(jnp.bfloat16),
                       preferred_element_type=jnp.float32)

    L = raw["ln1_w"].shape[0]
    sA, sB, sp, sx, sffn = (hidden_state[j] for j in range(5))
    nA, nB, npv, nx, nffn = [], [], [], [], []

    x = _layernorm(x, raw["ln0_w"], raw["ln0_b"])
    for i in range(L):
        sc = x
        h = _layernorm(x, raw["ln1_w"][i], raw["ln1_b"][i])
        tmk, tmv, tmr = raw["att_tmk"][i], raw["att_tmv"][i], raw["att_tmr"][i]
        xk = h * tmk + sx[i] * (1 - tmk)
        xv = h * tmv + sx[i] * (1 - tmv)
        xr = h * tmr + sx[i] * (1 - tmr)
        k = bdot(xk, raw["att_wk"][i])
        v = bdot(xv, raw["att_wv"][i])
        r = jax.nn.sigmoid(bdot(xr, raw["att_wr"][i]))
        ww = raw["att_tf"][i] + k
        p = jnp.maximum(sp[i], ww)
        e1, e2 = jnp.exp(sp[i] - p), jnp.exp(ww - p)
        a = e1 * sA[i] + e2 * v
        b = e1 * sB[i] + e2
        ww2 = sp[i] - jnp.exp(raw["att_td"][i])
        p2 = jnp.maximum(ww2, k)
        e1b, e2b = jnp.exp(ww2 - p2), jnp.exp(k - p2)
        nA.append(e1b * sA[i] + e2b * v)
        nB.append(e1b * sB[i] + e2b)
        npv.append(p2)
        nx.append(h)
        x = sc + bdot(r * a / b, raw["att_wo"][i])

        sc = x
        h2 = _layernorm(x, raw["ln2_w"][i], raw["ln2_b"][i])
        ftmk, ftmr = raw["ffn_tmk"][i], raw["ffn_tmr"][i]
        fxk = h2 * ftmk + sffn[i] * (1 - ftmk)
        fxr = h2 * ftmr + sffn[i] * (1 - ftmr)
        nffn.append(h2)
        fr = jax.nn.sigmoid(bdot(fxr, raw["ffn_wr"][i]))
        fk = jnp.square(jnp.maximum(bdot(fxk, raw["ffn_wk"][i]), 0.0))
        x = sc + fr * bdot(fk, raw["ffn_wv"][i])

    xo = _layernorm(x, raw["ln_out_w"], raw["ln_out_b"])
    logits = bdot(xo, raw["head_w"])
    new_hidden = jnp.stack(
        [jnp.stack(s, axis=0) for s in (nA, nB, npv, nx, nffn)], axis=0)
    return logits, new_hidden


if __name__ == "__main__":
    # Small but hardware-aligned shapes: B fills the f32 sublane, H/F/V are
    # multiples of 128 (lane-dense, whole MXU tiles).
    B, H, F, V, L = 8, 128, 256, 256, 4

    key = jax.random.PRNGKey(0)
    kx, kp = jax.random.split(key)
    raw = make_params(kp, L, H, F, V)
    packed = pack_params(raw)

    # x is the already-embedded single-token hidden state (B, H); nn.Embedding
    # is defined in the PyTorch module but never used inside forward().
    x = jax.random.normal(kx, (B, H), jnp.float32)

    # forward_initialzation: zeros, with state_p initialized to -1e30.
    hidden = jnp.zeros((5, L, B, H), jnp.float32).at[2].set(-1e30)

    fwd = jax.jit(rwkv_v4_forward)
    logits, new_hidden = fwd(x, hidden, packed)
    logits = jax.block_until_ready(logits)
    new_hidden = jax.block_until_ready(new_hidden)

    ref_logits, ref_hidden = rwkv_v4_reference(x, hidden, raw)

    assert logits.shape == (B, V)
    assert new_hidden.shape == (5, L, B, H)
    assert jnp.allclose(logits, ref_logits, rtol=2e-3, atol=2e-3), \
        float(jnp.max(jnp.abs(logits - ref_logits)))
    assert jnp.allclose(new_hidden, ref_hidden, rtol=2e-3, atol=2e-3), \
        float(jnp.max(jnp.abs(new_hidden - ref_hidden)))

    print("KERNEL_OK")
</pallas_src>

<mosaic_0001>
module attributes {stable_mosaic.version = 11 : i64} {
  func.func @rwkv_layer_kernel(%arg0: i32, %arg1: memref<8x128xf32, #tpu.memory_space<vmem>>, %arg2: memref<1x16x128xf32, #tpu.memory_space<vmem>>, %arg3: memref<1x128x896xbf16, #tpu.memory_space<vmem>>, %arg4: memref<1x256x128xbf16, #tpu.memory_space<vmem>>, %arg5: memref<5x1x8x128xf32, #tpu.memory_space<vmem>>, %arg6: memref<8x128xf32, #tpu.memory_space<vmem>>, %arg7: memref<5x1x8x128xf32, #tpu.memory_space<vmem>>) attributes {dimension_semantics = [#tpu.dimension_semantics<arbitrary>], iteration_bounds = array<i64: 4>, scalar_prefetch = 0 : i64, scratch_operands = 0 : i64, tpu.core_type = #tpu.core_type<tc>, window_params = [{pipeline_mode = #tpu.pipeline_mode<synchronous>, transform_indices = @transform_0, window_bounds = array<i64: 8, 128>}, {transform_indices = @transform_1, window_bounds = array<i64: 1, 16, 128>}, {transform_indices = @transform_2, window_bounds = array<i64: 1, 128, 896>}, {transform_indices = @transform_3, window_bounds = array<i64: 1, 256, 128>}, {transform_indices = @transform_4, window_bounds = array<i64: 5, 1, 8, 128>}, {pipeline_mode = #tpu.pipeline_mode<synchronous>, transform_indices = @transform_5, window_bounds = array<i64: 8, 128>}, {transform_indices = @transform_6, window_bounds = array<i64: 5, 1, 8, 128>}]} {
    %c0_i32 = arith.constant 0 : i32
    %0 = arith.cmpi eq, %arg0, %c0_i32 : i32
    %1 = arith.extui %0 : i1 to i32
    %c0_i32_0 = arith.constant 0 : i32
    %2 = arith.cmpi ne, %1, %c0_i32_0 : i32
    scf.if %2 {
      %c0_83 = arith.constant 0 : index
      %c0_84 = arith.constant 0 : index
      %193 = vector.load %arg1[%c0_83, %c0_84] : memref<8x128xf32, #tpu.memory_space<vmem>>, vector<8x128xf32>
      %c0_85 = arith.constant 0 : index
      %c0_86 = arith.constant 0 : index
      %194 = vector.load %arg6[%c0_85, %c0_86] : memref<8x128xf32, #tpu.memory_space<vmem>>, vector<8x128xf32>
      tpu.vector_store %arg6[%c0_85, %c0_86], %193 {strides = array<i32>} : memref<8x128xf32, #tpu.memory_space<vmem>>, vector<8x128xf32>,
    } else {
    }
    %c0 = arith.constant 0 : index
    %c0_1 = arith.constant 0 : index
    %3 = vector.load %arg6[%c0, %c0_1] : memref<8x128xf32, #tpu.memory_space<vmem>>, vector<8x128xf32>
    %c0_2 = arith.constant 0 : index
    %c0_3 = arith.constant 0 : index
    %c0_4 = arith.constant 0 : index
    %4 = vector.load %arg2[%c0_2, %c0_3, %c0_4] : memref<1x16x128xf32, #tpu.memory_space<vmem>>, vector<1x16x128xf32>
    %5 = vector.shape_cast %4 : vector<1x16x128xf32> to vector<16x128xf32>
    %6 = vector.extract_strided_slice %5 {offsets = [0, 0], sizes = [1, 128], strides = [1, 1]} : vector<16x128xf32> to vector<1x128xf32>
    %7 = vector.extract_strided_slice %5 {offsets = [1, 0], sizes = [1, 128], strides = [1, 1]} : vector<16x128xf32> to vector<1x128xf32>
    %8 = vector.extract_strided_slice %5 {offsets = [2, 0], sizes = [1, 128], strides = [1, 1]} : vector<16x128xf32> to vector<1x128xf32>
    %9 = vector.extract_strided_slice %5 {offsets = [3, 0], sizes = [1, 128], strides = [1, 1]} : vector<16x128xf32> to vector<1x128xf32>
    %10 = vector.extract_strided_slice %5 {offsets = [4, 0], sizes = [1, 128], strides = [1, 1]} : vector<16x128xf32> to vector<1x128xf32>
    %11 = vector.extract_strided_slice %5 {offsets = [5, 0], sizes = [1, 128], strides = [1, 1]} : vector<16x128xf32> to vector<1x128xf32>
    %12 = vector.extract_strided_slice %5 {offsets = [6, 0], sizes = [1, 128], strides = [1, 1]} : vector<16x128xf32> to vector<1x128xf32>
    %13 = vector.extract_strided_slice %5 {offsets = [7, 0], sizes = [1, 128], strides = [1, 1]} : vector<16x128xf32> to vector<1x128xf32>
    %14 = vector.extract_strided_slice %5 {offsets = [8, 0], sizes = [1, 128], strides = [1, 1]} : vector<16x128xf32> to vector<1x128xf32>
    %15 = vector.extract_strided_slice %5 {offsets = [9, 0], sizes = [1, 128], strides = [1, 1]} : vector<16x128xf32> to vector<1x128xf32>
    %16 = vector.extract_strided_slice %5 {offsets = [10, 0], sizes = [1, 128], strides = [1, 1]} : vector<16x128xf32> to vector<1x128xf32>
    %c0_5 = arith.constant 0 : index
    %c0_6 = arith.constant 0 : index
    %c0_7 = arith.constant 0 : index
    %c0_8 = arith.constant 0 : index
    %17 = vector.load %arg5[%c0_5, %c0_6, %c0_7, %c0_8] : memref<5x1x8x128xf32, #tpu.memory_space<vmem>>, vector<1x1x8x128xf32>
    %18 = vector.shape_cast %17 : vector<1x1x8x128xf32> to vector<8x128xf32>
    %c1 = arith.constant 1 : index
    %c0_9 = arith.constant 0 : index
    %c0_10 = arith.constant 0 : index
    %c0_11 = arith.constant 0 : index
    %19 = vector.load %arg5[%c1, %c0_9, %c0_10, %c0_11] : memref<5x1x8x128xf32, #tpu.memory_space<vmem>>, vector<1x1x8x128xf32>
    %20 = vector.shape_cast %19 : vector<1x1x8x128xf32> to vector<8x128xf32>
    %c2 = arith.constant 2 : index
    %c0_12 = arith.constant 0 : index
    %c0_13 = arith.constant 0 : index
    %c0_14 = arith.constant 0 : index
    %21 = vector.load %arg5[%c2, %c0_12, %c0_13, %c0_14] : memref<5x1x8x128xf32, #tpu.memory_space<vmem>>, vector<1x1x8x128xf32>
    %22 = vector.shape_cast %21 : vector<1x1x8x128xf32> to vector<8x128xf32>
    %c3 = arith.constant 3 : index
    %c0_15 = arith.constant 0 : index
    %c0_16 = arith.constant 0 : index
    %c0_17 = arith.constant 0 : index
    %23 = vector.load %arg5[%c3, %c0_15, %c0_16, %c0_17] : memref<5x1x8x128xf32, #tpu.memory_space<vmem>>, vector<1x1x8x128xf32>
    %24 = vector.shape_cast %23 : vector<1x1x8x128xf32> to vector<8x128xf32>
    %c4 = arith.constant 4 : index
    %c0_18 = arith.constant 0 : index
    %c0_19 = arith.constant 0 : index
    %c0_20 = arith.constant 0 : index
    %25 = vector.load %arg5[%c4, %c0_18, %c0_19, %c0_20] : memref<5x1x8x128xf32, #tpu.memory_space<vmem>>, vector<1x1x8x128xf32>
    %26 = vector.shape_cast %25 : vector<1x1x8x128xf32> to vector<8x128xf32>
    %cst = arith.constant dense<0.000000e+00> : vector<8xf32>
    %27 = vector.multi_reduction <add>, %3, %cst [1] : vector<8x128xf32> to vector<8xf32>
    %28 = vector.shape_cast %27 : vector<8xf32> to vector<8x1xf32>
    %cst_21 = arith.constant 1.280000e+02 : f32
    %29 = vector.broadcast %cst_21 : f32 to vector<8x1xf32>
    %30 = arith.divf %28, %29 : vector<8x1xf32>
    %31 = vector.broadcast %30 : vector<8x1xf32> to vector<8x128xf32>
    %32 = arith.subf %3, %31 : vector<8x128xf32>
    %33 = arith.mulf %32, %32 : vector<8x128xf32>
    %cst_22 = arith.constant dense<0.000000e+00> : vector<8xf32>
    %34 = vector.multi_reduction <add>, %33, %cst_22 [1] : vector<8x128xf32> to vector<8xf32>
    %35 = vector.shape_cast %34 : vector<8xf32> to vector<8x1xf32>
    %cst_23 = arith.constant 1.280000e+02 : f32
    %36 = vector.broadcast %cst_23 : f32 to vector<8x1xf32>
    %37 = arith.divf %35, %36 : vector<8x1xf32>
    %38 = vector.broadcast %30 : vector<8x1xf32> to vector<8x128xf32>
    %39 = arith.subf %3, %38 : vector<8x128xf32>
    %cst_24 = arith.constant 9.99999974E-6 : f32
    %40 = vector.broadcast %cst_24 : f32 to vector<8x1xf32>
    %41 = arith.addf %37, %40 : vector<8x1xf32>
    %42 = math.rsqrt %41 : vector<8x1xf32>
    %43 = vector.broadcast %42 : vector<8x1xf32> to vector<8x128xf32>
    %44 = arith.mulf %39, %43 : vector<8x128xf32>
    %45 = vector.broadcast %6 : vector<1x128xf32> to vector<8x128xf32>
    %46 = arith.mulf %44, %45 : vector<8x128xf32>
    %47 = vector.broadcast %7 : vector<1x128xf32> to vector<8x128xf32>
    %48 = arith.addf %46, %47 : vector<8x128xf32>
    %49 = vector.broadcast %12 : vector<1x128xf32> to vector<8x128xf32>
    %50 = arith.mulf %48, %49 : vector<8x128xf32>
    %cst_25 = arith.constant 1.000000e+00 : f32
    %51 = vector.broadcast %cst_25 : f32 to vector<1x128xf32>
    %52 = arith.subf %51, %12 : vector<1x128xf32>
    %53 = vector.broadcast %52 : vector<1x128xf32> to vector<8x128xf32>
    %54 = arith.mulf %24, %53 : vector<8x128xf32>
    %55 = arith.addf %50, %54 : vector<8x128xf32>
    %56 = vector.broadcast %13 : vector<1x128xf32> to vector<8x128xf32>
    %57 = arith.mulf %48, %56 : vector<8x128xf32>
    %cst_26 = arith.constant 1.000000e+00 : f32
    %58 = vector.broadcast %cst_26 : f32 to vector<1x128xf32>
    %59 = arith.subf %58, %13 : vector<1x128xf32>
    %60 = vector.broadcast %59 : vector<1x128xf32> to vector<8x128xf32>
    %61 = arith.mulf %24, %60 : vector<8x128xf32>
    %62 = arith.addf %57, %61 : vector<8x128xf32>
    %63 = vector.broadcast %14 : vector<1x128xf32> to vector<8x128xf32>
    %64 = arith.mulf %48, %63 : vector<8x128xf32>
    %cst_27 = arith.constant 1.000000e+00 : f32
    %65 = vector.broadcast %cst_27 : f32 to vector<1x128xf32>
    %66 = arith.subf %65, %14 : vector<1x128xf32>
    %67 = vector.broadcast %66 : vector<1x128xf32> to vector<8x128xf32>
    %68 = arith.mulf %24, %67 : vector<8x128xf32>
    %69 = arith.addf %64, %68 : vector<8x128xf32>
    %c0_28 = arith.constant 0 : index
    %c0_29 = arith.constant 0 : index
    %c0_30 = arith.constant 0 : index
    %70 = vector.load %arg3[%c0_28, %c0_29, %c0_30] : memref<1x128x896xbf16, #tpu.memory_space<vmem>>, vector<1x128x128xbf16>
    %71 = vector.shape_cast %70 : vector<1x128x128xbf16> to vector<128x128xbf16>
    %72 = arith.truncf %55 : vector<8x128xf32> to vector<8x128xbf16>
    %cst_31 = arith.constant dense<0.000000e+00> : vector<8x128xf32>
    %73 = tpu.matmul %72, %71, %cst_31 {dimension_numbers = #tpu.dot_dimension_numbers<[1], [0], [0], [1], [0, 0, 1, 1], [], []>} : vector<8x128xbf16>, vector<128x128xbf16>, vector<8x128xf32> -> vector<8x128xf32>
    %c0_32 = arith.constant 0 : index
    %c0_33 = arith.constant 0 : index
    %c128 = arith.constant 128 : index
    %74 = vector.load %arg3[%c0_32, %c0_33, %c128] : memref<1x128x896xbf16, #tpu.memory_space<vmem>>, vector<1x128x128xbf16>
    %75 = vector.shape_cast %74 : vector<1x128x128xbf16> to vector<128x128xbf16>
    %76 = arith.truncf %62 : vector<8x128xf32> to vector<8x128xbf16>
    %cst_34 = arith.constant dense<0.000000e+00> : vector<8x128xf32>
    %77 = tpu.matmul %76, %75, %cst_34 {dimension_numbers = #tpu.dot_dimension_numbers<[1], [0], [0], [1], [0, 0, 1, 1], [], []>} : vector<8x128xbf16>, vector<128x128xbf16>, vector<8x128xf32> -> vector<8x128xf32>
    %c0_35 = arith.constant 0 : index
    %c0_36 = arith.constant 0 : index
    %c256 = arith.constant 256 : index
    %78 = vector.load %arg3[%c0_35, %c0_36, %c256] : memref<1x128x896xbf16, #tpu.memory_space<vmem>>, vector<1x128x128xbf16>
    %79 = vector.shape_cast %78 : vector<1x128x128xbf16> to vector<128x128xbf16>
    %80 = arith.truncf %69 : vector<8x128xf32> to vector<8x128xbf16>
    %cst_37 = arith.constant dense<0.000000e+00> : vector<8x128xf32>
    %81 = tpu.matmul %80, %79, %cst_37 {dimension_numbers = #tpu.dot_dimension_numbers<[1], [0], [0], [1], [0, 0, 1, 1], [], []>} : vector<8x128xbf16>, vector<128x128xbf16>, vector<8x128xf32> -> vector<8x128xf32>
    %82 = arith.negf %81 : vector<8x128xf32>
    %83 = math.exp %82 : vector<8x128xf32>
    %cst_38 = arith.constant 1.000000e+00 : f32
    %84 = vector.broadcast %cst_38 : f32 to vector<8x128xf32>
    %85 = arith.addf %84, %83 : vector<8x128xf32>
    %86 = arith.divf %84, %85 : vector<8x128xf32>
    %87 = vector.broadcast %11 : vector<1x128xf32> to vector<8x128xf32>
    %88 = arith.addf %87, %73 : vector<8x128xf32>
    %89 = arith.maximumf %22, %88 : vector<8x128xf32>
    %90 = arith.subf %22, %89 : vector<8x128xf32>
    %91 = math.exp %90 : vector<8x128xf32>
    %92 = arith.subf %88, %89 : vector<8x128xf32>
    %93 = math.exp %92 : vector<8x128xf32>
    %94 = arith.mulf %91, %18 : vector<8x128xf32>
    %95 = arith.mulf %93, %77 : vector<8x128xf32>
    %96 = arith.addf %94, %95 : vector<8x128xf32>
    %97 = arith.mulf %91, %20 : vector<8x128xf32>
    %98 = arith.addf %97, %93 : vector<8x128xf32>
    %99 = math.exp %10 : vector<1x128xf32>
    %100 = vector.broadcast %99 : vector<1x128xf32> to vector<8x128xf32>
    %101 = arith.subf %22, %100 : vector<8x128xf32>
    %102 = arith.maximumf %101, %73 : vector<8x128xf32>
    %103 = arith.subf %101, %102 : vector<8x128xf32>
    %104 = math.exp %103 : vector<8x128xf32>
    %105 = arith.subf %73, %102 : vector<8x128xf32>
    %106 = math.exp %105 : vector<8x128xf32>
    %107 = arith.mulf %86, %96 : vector<8x128xf32>
    %108 = arith.divf %107, %98 : vector<8x128xf32>
    %c0_39 = arith.constant 0 : index
    %c0_40 = arith.constant 0 : index
    %c384 = arith.constant 384 : index
    %109 = vector.load %arg3[%c0_39, %c0_40, %c384] : memref<1x128x896xbf16, #tpu.memory_space<vmem>>, vector<1x128x128xbf16>
    %110 = vector.shape_cast %109 : vector<1x128x128xbf16> to vector<128x128xbf16>
    %111 = arith.truncf %108 : vector<8x128xf32> to vector<8x128xbf16>
    %cst_41 = arith.constant dense<0.000000e+00> : vector<8x128xf32>
    %112 = tpu.matmul %111, %110, %cst_41 {dimension_numbers = #tpu.dot_dimension_numbers<[1], [0], [0], [1], [0, 0, 1, 1], [], []>} : vector<8x128xbf16>, vector<128x128xbf16>, vector<8x128xf32> -> vector<8x128xf32>
    %113 = arith.addf %3, %112 : vector<8x128xf32>
    %cst_42 = arith.constant dense<0.000000e+00> : vector<8xf32>
    %114 = vector.multi_reduction <add>, %113, %cst_42 [1] : vector<8x128xf32> to vector<8xf32>
    %115 = vector.shape_cast %114 : vector<8xf32> to vector<8x1xf32>
    %cst_43 = arith.constant 1.280000e+02 : f32
    %116 = vector.broadcast %cst_43 : f32 to vector<8x1xf32>
    %117 = arith.divf %115, %116 : vector<8x1xf32>
    %118 = vector.broadcast %117 : vector<8x1xf32> to vector<8x128xf32>
    %119 = arith.subf %113, %118 : vector<8x128xf32>
    %120 = arith.mulf %119, %119 : vector<8x128xf32>
    %cst_44 = arith.constant dense<0.000000e+00> : vector<8xf32>
    %121 = vector.multi_reduction <add>, %120, %cst_44 [1] : vector<8x128xf32> to vector<8xf32>
    %122 = vector.shape_cast %121 : vector<8xf32> to vector<8x1xf32>
    %cst_45 = arith.constant 1.280000e+02 : f32
    %123 = vector.broadcast %cst_45 : f32 to vector<8x1xf32>
    %124 = arith.divf %122, %123 : vector<8x1xf32>
    %125 = vector.broadcast %117 : vector<8x1xf32> to vector<8x128xf32>
    %126 = arith.subf %113, %125 : vector<8x128xf32>
    %cst_46 = arith.constant 9.99999974E-6 : f32
    %127 = vector.broadcast %cst_46 : f32 to vector<8x1xf32>
    %128 = arith.addf %124, %127 : vector<8x1xf32>
    %129 = math.rsqrt %128 : vector<8x1xf32>
    %130 = vector.broadcast %129 : vector<8x1xf32> to vector<8x128xf32>
    %131 = arith.mulf %126, %130 : vector<8x128xf32>
    %132 = vector.broadcast %8 : vector<1x128xf32> to vector<8x128xf32>
    %133 = arith.mulf %131, %132 : vector<8x128xf32>
    %134 = vector.broadcast %9 : vector<1x128xf32> to vector<8x128xf32>
    %135 = arith.addf %133, %134 : vector<8x128xf32>
    %136 = vector.broadcast %15 : vector<1x128xf32> to vector<8x128xf32>
    %137 = arith.mulf %135, %136 : vector<8x128xf32>
    %cst_47 = arith.constant 1.000000e+00 : f32
    %138 = vector.broadcast %cst_47 : f32 to vector<1x128xf32>
    %139 = arith.subf %138, %15 : vector<1x128xf32>
    %140 = vector.broadcast %139 : vector<1x128xf32> to vector<8x128xf32>
    %141 = arith.mulf %26, %140 : vector<8x128xf32>
    %142 = arith.addf %137, %141 : vector<8x128xf32>
    %143 = vector.broadcast %16 : vector<1x128xf32> to vector<8x128xf32>
    %144 = arith.mulf %135, %143 : vector<8x128xf32>
    %cst_48 = arith.constant 1.000000e+00 : f32
    %145 = vector.broadcast %cst_48 : f32 to vector<1x128xf32>
    %146 = arith.subf %145, %16 : vector<1x128xf32>
    %147 = vector.broadcast %146 : vector<1x128xf32> to vector<8x128xf32>
    %148 = arith.mulf %26, %147 : vector<8x128xf32>
    %149 = arith.addf %144, %148 : vector<8x128xf32>
    %c0_49 = arith.constant 0 : index
    %c0_50 = arith.constant 0 : index
    %c768 = arith.constant 768 : index
    %150 = vector.load %arg3[%c0_49, %c0_50, %c768] : memref<1x128x896xbf16, #tpu.memory_space<vmem>>, vector<1x128x128xbf16>
    %151 = vector.shape_cast %150 : vector<1x128x128xbf16> to vector<128x128xbf16>
    %152 = arith.truncf %149 : vector<8x128xf32> to vector<8x128xbf16>
    %cst_51 = arith.constant dense<0.000000e+00> : vector<8x128xf32>
    %153 = tpu.matmul %152, %151, %cst_51 {dimension_numbers = #tpu.dot_dimension_numbers<[1], [0], [0], [1], [0, 0, 1, 1], [], []>} : vector<8x128xbf16>, vector<128x128xbf16>, vector<8x128xf32> -> vector<8x128xf32>
    %154 = arith.negf %153 : vector<8x128xf32>
    %155 = math.exp %154 : vector<8x128xf32>
    %cst_52 = arith.constant 1.000000e+00 : f32
    %156 = vector.broadcast %cst_52 : f32 to vector<8x128xf32>
    %157 = arith.addf %156, %155 : vector<8x128xf32>
    %158 = arith.divf %156, %157 : vector<8x128xf32>
    %c0_53 = arith.constant 0 : index
    %c0_54 = arith.constant 0 : index
    %c512 = arith.constant 512 : index
    %159 = vector.load %arg3[%c0_53, %c0_54, %c512] : memref<1x128x896xbf16, #tpu.memory_space<vmem>>, vector<1x128x256xbf16>
    %160 = vector.shape_cast %159 : vector<1x128x256xbf16> to vector<128x256xbf16>
    %161 = arith.truncf %142 : vector<8x128xf32> to vector<8x128xbf16>
    %cst_55 = arith.constant dense<0.000000e+00> : vector<8x256xf32>
    %162 = tpu.matmul %161, %160, %cst_55 {dimension_numbers = #tpu.dot_dimension_numbers<[1], [0], [0], [1], [0, 0, 1, 1], [], []>} : vector<8x128xbf16>, vector<128x256xbf16>, vector<8x256xf32> -> vector<8x256xf32>
    %cst_56 = arith.constant 0.000000e+00 : f32
    %163 = vector.broadcast %cst_56 : f32 to vector<8x256xf32>
    %164 = arith.maximumf %162, %163 : vector<8x256xf32>
    %165 = arith.mulf %164, %164 : vector<8x256xf32>
    %c0_57 = arith.constant 0 : index
    %c0_58 = arith.constant 0 : index
    %c0_59 = arith.constant 0 : index
    %166 = vector.load %arg4[%c0_57, %c0_58, %c0_59] : memref<1x256x128xbf16, #tpu.memory_space<vmem>>, vector<1x256x128xbf16>
    %167 = vector.shape_cast %166 : vector<1x256x128xbf16> to vector<256x128xbf16>
    %168 = arith.truncf %165 : vector<8x256xf32> to vector<8x256xbf16>
    %cst_60 = arith.constant dense<0.000000e+00> : vector<8x128xf32>
    %169 = tpu.matmul %168, %167, %cst_60 {dimension_numbers = #tpu.dot_dimension_numbers<[1], [0], [0], [1], [0, 0, 1, 1], [], []>} : vector<8x256xbf16>, vector<256x128xbf16>, vector<8x128xf32> -> vector<8x128xf32>
    %170 = arith.mulf %158, %169 : vector<8x128xf32>
    %171 = arith.addf %113, %170 : vector<8x128xf32>
    %c0_61 = arith.constant 0 : index
    %c0_62 = arith.constant 0 : index
    %172 = vector.load %arg6[%c0_61, %c0_62] : memref<8x128xf32, #tpu.memory_space<vmem>>, vector<8x128xf32>
    tpu.vector_store %arg6[%c0_61, %c0_62], %171 {strides = array<i32>} : memref<8x128xf32, #tpu.memory_space<vmem>>, vector<8x128xf32>,
    %173 = arith.mulf %104, %18 : vector<8x128xf32>
    %174 = arith.mulf %106, %77 : vector<8x128xf32>
    %175 = arith.addf %173, %174 : vector<8x128xf32>
    %c0_63 = arith.constant 0 : index
    %c0_64 = arith.constant 0 : index
    %c0_65 = arith.constant 0 : index
    %c0_66 = arith.constant 0 : index
    %176 = vector.load %arg7[%c0_63, %c0_64, %c0_65, %c0_66] : memref<5x1x8x128xf32, #tpu.memory_space<vmem>>, vector<1x1x8x128xf32>
    %177 = vector.shape_cast %176 : vector<1x1x8x128xf32> to vector<8x128xf32>
    %178 = vector.shape_cast %175 : vector<8x128xf32> to vector<1x1x8x128xf32>
    tpu.vector_store %arg7[%c0_63, %c0_64, %c0_65, %c0_66], %178 {strides = array<i32>} : memref<5x1x8x128xf32, #tpu.memory_space<vmem>>, vector<1x1x8x128xf32>,
    %179 = arith.mulf %104, %20 : vector<8x128xf32>
    %180 = arith.addf %179, %106 : vector<8x128xf32>
    %c1_67 = arith.constant 1 : index
    %c0_68 = arith.constant 0 : index
    %c0_69 = arith.constant 0 : index
    %c0_70 = arith.constant 0 : index
    %181 = vector.load %arg7[%c1_67, %c0_68, %c0_69, %c0_70] : memref<5x1x8x128xf32, #tpu.memory_space<vmem>>, vector<1x1x8x128xf32>
    %182 = vector.shape_cast %181 : vector<1x1x8x128xf32> to vector<8x128xf32>
    %183 = vector.shape_cast %180 : vector<8x128xf32> to vector<1x1x8x128xf32>
    tpu.vector_store %arg7[%c1_67, %c0_68, %c0_69, %c0_70], %183 {strides = array<i32>} : memref<5x1x8x128xf32, #tpu.memory_space<vmem>>, vector<1x1x8x128xf32>,
    %c2_71 = arith.constant 2 : index
    %c0_72 = arith.constant 0 : index
    %c0_73 = arith.constant 0 : index
    %c0_74 = arith.constant 0 : index
    %184 = vector.load %arg7[%c2_71, %c0_72, %c0_73, %c0_74] : memref<5x1x8x128xf32, #tpu.memory_space<vmem>>, vector<1x1x8x128xf32>
    %185 = vector.shape_cast %184 : vector<1x1x8x128xf32> to vector<8x128xf32>
    %186 = vector.shape_cast %102 : vector<8x128xf32> to vector<1x1x8x128xf32>
    tpu.vector_store %arg7[%c2_71, %c0_72, %c0_73, %c0_74], %186 {strides = array<i32>} : memref<5x1x8x128xf32, #tpu.memory_space<vmem>>, vector<1x1x8x128xf32>,
    %c3_75 = arith.constant 3 : index
    %c0_76 = arith.constant 0 : index
    %c0_77 = arith.constant 0 : index
    %c0_78 = arith.constant 0 : index
    %187 = vector.load %arg7[%c3_75, %c0_76, %c0_77, %c0_78] : memref<5x1x8x128xf32, #tpu.memory_space<vmem>>, vector<1x1x8x128xf32>
    %188 = vector.shape_cast %187 : vector<1x1x8x128xf32> to vector<8x128xf32>
    %189 = vector.shape_cast %48 : vector<8x128xf32> to vector<1x1x8x128xf32>
    tpu.vector_store %arg7[%c3_75, %c0_76, %c0_77, %c0_78], %189 {strides = array<i32>} : memref<5x1x8x128xf32, #tpu.memory_space<vmem>>, vector<1x1x8x128xf32>,
    %c4_79 = arith.constant 4 : index
    %c0_80 = arith.constant 0 : index
    %c0_81 = arith.constant 0 : index
    %c0_82 = arith.constant 0 : index
    %190 = vector.load %arg7[%c4_79, %c0_80, %c0_81, %c0_82] : memref<5x1x8x128xf32, #tpu.memory_space<vmem>>, vector<1x1x8x128xf32>
    %191 = vector.shape_cast %190 : vector<1x1x8x128xf32> to vector<8x128xf32>
    %192 = vector.shape_cast %135 : vector<8x128xf32> to vector<1x1x8x128xf32>
    tpu.vector_store %arg7[%c4_79, %c0_80, %c0_81, %c0_82], %192 {strides = array<i32>} : memref<5x1x8x128xf32, #tpu.memory_space<vmem>>, vector<1x1x8x128xf32>,
    return
  }
  func.func @transform_0(%arg0: i32) -> (i32, i32) {
    %c0_i32 = arith.constant 0 : i32
    %c0_i32_0 = arith.constant 0 : i32
    %c0_i32_1 = arith.constant 0 : i32
    return %c0_i32, %c0_i32_0 : i32, i32
  }
  func.func @transform_1(%arg0: i32) -> (i32, i32, i32) {
    %c0_i32 = arith.constant 0 : i32
    %c0_i32_0 = arith.constant 0 : i32
    %c0_i32_1 = arith.constant 0 : i32
    return %arg0, %c0_i32, %c0_i32_0 : i32, i32, i32
  }
  func.func @transform_2(%arg0: i32) -> (i32, i32, i32) {
    %c0_i32 = arith.constant 0 : i32
    %c0_i32_0 = arith.constant 0 : i32
    %c0_i32_1 = arith.constant 0 : i32
    return %arg0, %c0_i32, %c0_i32_0 : i32, i32, i32
  }
  func.func @transform_3(%arg0: i32) -> (i32, i32, i32) {
    %c0_i32 = arith.constant 0 : i32
    %c0_i32_0 = arith.constant 0 : i32
    %c0_i32_1 = arith.constant 0 : i32
    return %arg0, %c0_i32, %c0_i32_0 : i32, i32, i32
  }
  func.func @transform_4(%arg0: i32) -> (i32, i32, i32, i32) {
    %c0_i32 = arith.constant 0 : i32
    %c0_i32_0 = arith.constant 0 : i32
    %c0_i32_1 = arith.constant 0 : i32
    %c0_i32_2 = arith.constant 0 : i32
    return %c0_i32, %arg0, %c0_i32_0, %c0_i32_1 : i32, i32, i32, i32
  }
  func.func @transform_5(%arg0: i32) -> (i32, i32) {
    %c0_i32 = arith.constant 0 : i32
    %c0_i32_0 = arith.constant 0 : i32
    %c0_i32_1 = arith.constant 0 : i32
    return %c0_i32, %c0_i32_0 : i32, i32
  }
  func.func @transform_6(%arg0: i32) -> (i32, i32, i32, i32) {
    %c0_i32 = arith.constant 0 : i32
    %c0_i32_0 = arith.constant 0 : i32
    %c0_i32_1 = arith.constant 0 : i32
    %c0_i32_2 = arith.constant 0 : i32
    return %c0_i32, %arg0, %c0_i32_0, %c0_i32_1 : i32, i32, i32, i32
  }
}

module attributes {stable_mosaic.version = 11 : i64} {
  func.func @head_kernel(%arg0: i32, %arg1: memref<8x128xf32, #tpu.memory_space<vmem>>, %arg2: memref<128x256xbf16, #tpu.memory_space<vmem>>, %arg3: memref<8x256xf32, #tpu.memory_space<vmem>>) attributes {dimension_semantics = [#tpu.dimension_semantics<parallel>], iteration_bounds = array<i64: 1>, scalar_prefetch = 0 : i64, scratch_operands = 0 : i64, tpu.core_type = #tpu.core_type<tc>, window_params = [{pipeline_mode = #tpu.pipeline_mode<synchronous>, transform_indices = @transform_0, window_bounds = array<i64: 8, 128>}, {transform_indices = @transform_1, window_bounds = array<i64: 128, 256>}, {transform_indices = @transform_2, window_bounds = array<i64: 8, 256>}]} {
    %c0 = arith.constant 0 : index
    %c0_0 = arith.constant 0 : index
    %0 = vector.load %arg1[%c0, %c0_0] : memref<8x128xf32, #tpu.memory_space<vmem>>, vector<8x128xf32>
    %1 = arith.truncf %0 : vector<8x128xf32> to vector<8x128xbf16>
    %c0_1 = arith.constant 0 : index
    %c0_2 = arith.constant 0 : index
    %2 = vector.load %arg2[%c0_1, %c0_2] : memref<128x256xbf16, #tpu.memory_space<vmem>>, vector<128x256xbf16>
    %cst = arith.constant dense<0.000000e+00> : vector<8x256xf32>
    %3 = tpu.matmul %1, %2, %cst {dimension_numbers = #tpu.dot_dimension_numbers<[1], [0], [0], [1], [0, 0, 1, 1], [], []>} : vector<8x128xbf16>, vector<128x256xbf16>, vector<8x256xf32> -> vector<8x256xf32>
    %c0_3 = arith.constant 0 : index
    %c0_4 = arith.constant 0 : index
    %4 = vector.load %arg3[%c0_3, %c0_4] : memref<8x256xf32, #tpu.memory_space<vmem>>, vector<8x256xf32>
    tpu.vector_store %arg3[%c0_3, %c0_4], %3 {strides = array<i32>} : memref<8x256xf32, #tpu.memory_space<vmem>>, vector<8x256xf32>,
    return
  }
  func.func @transform_0(%arg0: i32) -> (i32, i32) {
    %c0_i32 = arith.constant 0 : i32
    %c0_i32_0 = arith.constant 0 : i32
    %c0_i32_1 = arith.constant 0 : i32
    return %c0_i32, %c0_i32_0 : i32, i32
  }
  func.func @transform_1(%arg0: i32) -> (i32, i32) {
    %c0_i32 = arith.constant 0 : i32
    %c0_i32_0 = arith.constant 0 : i32
    return %c0_i32, %arg0 : i32, i32
  }
  func.func @transform_2(%arg0: i32) -> (i32, i32) {
    %c0_i32 = arith.constant 0 : i32
    %c0_i32_0 = arith.constant 0 : i32
    return %c0_i32, %arg0 : i32, i32
  }
}

</mosaic_0001>

<llo_original>
// kernel: rwkv_v4_forward.3
$region0: #{rwkv_v4_forward.3}
  #allocation0 [shape = 'u32[]', space=smem, size = 0x4, offset = 0x4, fixed_abs, tag = 'smem constant byte address 0x4 - core index']
  #allocation1 [shape = 'u32[144,128]{1,0:T(1,128)}', space=vmem, size = 0x12000, scoped, tag = 'internal scratch']
  %s0 = inlined_call_operand.vmem [shape: f32[8,128], index: 0, kind: input, shape index: {}]
  %s1 = inlined_call_operand.vmem [shape: bf16[128,256], index: 1, kind: input, shape index: {}]
  %s2 = inlined_call_operand.hbm [shape: f32[8,256], index: 2, kind: output, shape index: {}]
  %s3 = sld [smem:[#allocation0]]
  $region18: #{rwkv_v4_forward.3} parent=0
    _
  %s5 = ssub.s32 1, %s3
  %s6 = scalar_select 0, %s5, %s3
  $region1: #{rwkv_v4_forward.3} parent=0
    #allocation2 [shape = 'u8[8192]{0}', space=vmem, size = 0x2000, scoped, tag = 'output window, operand 0, single buffered']
    #allocation3 [shape = 's32[1]{0}', space=sflag, size = 0x4, scoped, tag = 'scoped memory for rwkv_v4_forward.3']
    %7 = vsyncpa [#allocation3], 0
    // Predicated region
    $region2: #{rwkv_v4_forward.3} parent=1 // pred_check
      _
    $region3: #{rwkv_v4_forward.3} parent=1 // pred_check_branch
      %9 = sbr.rel (0) target = $region5
    $region4: #{rwkv_v4_forward.3} parent=1 // pred_region
      _
    $region5: #{rwkv_v4_forward.3} parent=1 // pred_fallthru
      _
    // Predicated region
    $region6: #{rwkv_v4_forward.3} parent=1 // pred_check
      _
    $region7: #{rwkv_v4_forward.3} parent=1 // pred_check_branch
      %11 = sbr.rel (0) target = $region9
    $region8: #{rwkv_v4_forward.3} parent=1 // pred_region
      _
    $region9: #{rwkv_v4_forward.3} parent=1 // pred_fallthru
      _
    %v13 = vld [vmem:[%s0] sm:$0xff]
    %v14 = vpack.c.bf16 %v13, %v13
    %v15 = vld [vmem:[%s1] sm:$0xff]
    %v16 = vld [vmem:[%s1 + $0x8] sm:$0xff]
    %v17 = vld [vmem:[%s1 + $0x10] sm:$0xff]
    %v18 = vld [vmem:[%s1 + $0x18] sm:$0xff]
    %v19 = vld [vmem:[%s1 + $0x20] sm:$0xff]
    %v20 = vld [vmem:[%s1 + $0x28] sm:$0xff]
    %v21 = vld [vmem:[%s1 + $0x30] sm:$0xff]
    %v22 = vld [vmem:[%s1 + $0x38] sm:$0xff]
    %v23 = vld [vmem:[%s1 + $0x40] sm:$0xff]
    %v24 = vld [vmem:[%s1 + $0x48] sm:$0xff]
    %v25 = vld [vmem:[%s1 + $0x50] sm:$0xff]
    %v26 = vld [vmem:[%s1 + $0x58] sm:$0xff]
    %v27 = vld [vmem:[%s1 + $0x60] sm:$0xff]
    %v28 = vld [vmem:[%s1 + $0x68] sm:$0xff]
    %v29 = vld [vmem:[%s1 + $0x70] sm:$0xff]
    %v30 = vld [vmem:[%s1 + $0x78] sm:$0xff]
    %v47 = vunpack.c.l.b16 %v15
    %v48 = vunpack.c.h.b16 %v15
    %v49 = vunpack.c.l.b16 %v16
    %v50 = vunpack.c.h.b16 %v16
    %v51 = vunpack.c.l.b16 %v17
    %v52 = vunpack.c.h.b16 %v17
    %v53 = vunpack.c.l.b16 %v18
    %v54 = vunpack.c.h.b16 %v18
    %v55 = vunpack.c.l.b16 %v19
    %v56 = vunpack.c.h.b16 %v19
    %v57 = vunpack.c.l.b16 %v20
    %v58 = vunpack.c.h.b16 %v20
    %v59 = vunpack.c.l.b16 %v21
    %v60 = vunpack.c.h.b16 %v21
    %v61 = vunpack.c.l.b16 %v22
    %v62 = vunpack.c.h.b16 %v22
    %v63 = vunpack.c.l.b16 %v23
    %v64 = vunpack.c.h.b16 %v23
    %v65 = vunpack.c.l.b16 %v24
    %v66 = vunpack.c.h.b16 %v24
    %v67 = vunpack.c.l.b16 %v25
    %v68 = vunpack.c.h.b16 %v25
    %v69 = vunpack.c.l.b16 %v26
    %v70 = vunpack.c.h.b16 %v26
    %v71 = vunpack.c.l.b16 %v27
    %v72 = vunpack.c.h.b16 %v27
    %v73 = vunpack.c.l.b16 %v28
    %v74 = vunpack.c.h.b16 %v28
    %v75 = vunpack.c.l.b16 %v29
    %v76 = vunpack.c.h.b16 %v29
    %v77 = vunpack.c.l.b16 %v30
    %v78 = vunpack.c.h.b16 %v30
    %v79 = vpack.c.b16 %v49, %v47
    %v80 = vpack.c.b16 %v50, %v48
    %v81 = vpack.c.b16 %v53, %v51
    %v82 = vpack.c.b16 %v54, %v52
    %v83 = vpack.c.b16 %v57, %v55
    %v84 = vpack.c.b16 %v58, %v56
    %v85 = vpack.c.b16 %v61, %v59
    %v86 = vpack.c.b16 %v62, %v60
    %v87 = vpack.c.b16 %v65, %v63
    %v88 = vpack.c.b16 %v66, %v64
    %v89 = vpack.c.b16 %v69, %v67
    %v90 = vpack.c.b16 %v70, %v68
    %v91 = vpack.c.b16 %v73, %v71
    %v92 = vpack.c.b16 %v74, %v72
    %v93 = vpack.c.b16 %v77, %v75
    %v94 = vpack.c.b16 %v78, %v76
    %111 = vmatprep.subr.bf16.mxu0 %v80
    %112 = vmatpush1.bf16.msra.mxu0 %v79
    %113 = vmatprep.subr.bf16.mxu0 %v82
    %114 = vmatpush1.bf16.msra.mxu0 %v81
    %115 = vmatprep.subr.bf16.mxu0 %v84
    %116 = vmatpush1.bf16.msra.mxu0 %v83
    %117 = vmatprep.subr.bf16.mxu0 %v86
    %118 = vmatpush1.bf16.msra.mxu0 %v85
    %119 = vmatprep.subr.bf16.mxu0 %v88
    %120 = vmatpush1.bf16.msra.mxu0 %v87
    %121 = vmatprep.subr.bf16.mxu0 %v90
    %122 = vmatpush1.bf16.msra.mxu0 %v89
    %123 = vmatprep.subr.bf16.mxu0 %v92
    %124 = vmatpush1.bf16.msra.mxu0 %v91
    %125 = vmatprep.subr.bf16.mxu0 %v94
    %126 = vmatpush1.bf16.msra.mxu0 %v93
    %127 = vmatprep.subr.bf16.mxu0 0
    %128 = vmatpush1.bf16.msra.mxu0 0
    %129 = vmatprep.subr.bf16.mxu0 0
    %130 = vmatpush1.bf16.msra.mxu0 0
    %131 = vmatprep.subr.bf16.mxu0 0
    %132 = vmatpush1.bf16.msra.mxu0 0
    %133 = vmatprep.subr.bf16.mxu0 0
    %134 = vmatpush1.bf16.msra.mxu0 0
    %135 = vmatprep.subr.bf16.mxu0 0
    %136 = vmatpush1.bf16.msra.mxu0 0
    %137 = vmatprep.subr.bf16.mxu0 0
    %138 = vmatpush1.bf16.msra.mxu0 0
    %139 = vmatprep.subr.bf16.mxu0 0
    %140 = vmatpush1.bf16.msra.mxu0 0
    %141 = vmatprep.subr.bf16.mxu0 0
    %142 = vmatpush1.bf16.msra.mxu0 0
    %143 = vmatprep.mubr.bf16.mxu0 0
    %144 = vmatmul.mubr.bf16.gmra.mrb[0].mxu0 %v14
    %v145 = vpop.f32.mrb[0].mxu0
    %v146 = vadd.f32 0.0, %v145
    %v147 = vpop.f32.mrb[0].mxu0
    %v148 = vadd.f32 0.0, %v147
    %v149 = vpop.f32.mrb[0].mxu0
    %v150 = vpop.f32.mrb[0].mxu0
    %151 = vdwg.mxu0
    %152 = vst [vmem:[#allocation2] sm:$0xff] %v146
    %153 = vst [vmem:[#allocation2 + $0x8] sm:$0xff] %v148
    // Predicated region
    $region10: #{rwkv_v4_forward.3} parent=1 // pred_check
      _
    $region11: #{rwkv_v4_forward.3} parent=1 // pred_check_branch
      %155 = sbr.rel (0) target = $region13
    $region12: #{rwkv_v4_forward.3} parent=1 // pred_region
      %s157 = ssub.s32 256, 256
      %158 = vsyncadd [#allocation3], %s157
      %s160 = sshll.u32 [#allocation2], 4
      %s161 = int_to_ptr.vmem [resolvable:$true] %s160
      %163 = dma.vmem_to_hbm [thread:$0]  %s161, 256, %s2, [#allocation3]
    $region13: #{rwkv_v4_forward.3} parent=1 // pred_fallthru
      _
    // Predicated region
    $region14: #{rwkv_v4_forward.3} parent=1 // pred_check
      _
    $region15: #{rwkv_v4_forward.3} parent=1 // pred_check_branch
      %165 = sbr.rel (0) target = $region17
    $region16: #{rwkv_v4_forward.3} parent=1 // pred_region
      %166 = dma.done [#allocation3], 256
    $region17: #{rwkv_v4_forward.3} parent=1 // pred_fallthru
      _
    %167 = vsyncpa [#allocation3], 1

// kernel: rwkv_v4_forward.2
$region0: #{rwkv_v4_forward.2}
  #allocation0 [shape = 'u32[]', space=smem, size = 0x4, offset = 0x4, fixed_abs, tag = 'smem constant byte address 0x4 - core index']
  #allocation1 [shape = 'u32[144,128]{1,0:T(1,128)}', space=vmem, size = 0x12000, scoped, tag = 'internal scratch']
  %s0 = inlined_call_operand.vmem [shape: f32[8,128], index: 0, kind: input, shape index: {}]
  %s1 = inlined_call_operand.hbm [shape: f32[4,16,128], index: 1, kind: input, shape index: {}]
  %s2 = inlined_call_operand.hbm [shape: bf16[4,128,896], index: 2, kind: input, shape index: {}]
  %s3 = inlined_call_operand.hbm [shape: bf16[4,256,128], index: 3, kind: input, shape index: {}]
  %s4 = inlined_call_operand.hbm [shape: f32[5,4,8,128], index: 4, kind: input, shape index: {}]
  %s5 = inlined_call_operand.vmem [shape: f32[8,128], index: 5, kind: output, shape index: {0}]
  %s6 = inlined_call_operand.hbm [shape: f32[5,4,8,128], index: 6, kind: output, shape index: {1}]
  %7 = xla_tuple %s5, %s6
  %s8 = sld [smem:[#allocation0]]
  $region81: #{rwkv_v4_forward.2} parent=0
    _
  %s10 = ssub.s32 1, %s8
  %s11 = scalar_select 0, %s10, %s8
  $region1: #{rwkv_v4_forward.2} parent=0
    #allocation2 [shape = 'u8[16384]{0}', space=vmem, size = 0x4000, scoped, tag = 'input window, operand 1']
    #allocation3 [shape = 's32[2]{0}', space=sflag, size = 0x8, scoped, tag = 'scoped memory for rwkv_v4_forward.2']
    #allocation4 [shape = 's32[2]{0}', space=sflag, size = 0x8, scoped, tag = 'scoped memory for rwkv_v4_forward.2']
    #allocation5 [shape = 'u8[458752]{0}', space=vmem, size = 0x70000, scoped, tag = 'input window, operand 2']
    #allocation6 [shape = 's32[2]{0}', space=sflag, size = 0x8, scoped, tag = 'scoped memory for rwkv_v4_forward.2']
    #allocation7 [shape = 'u8[131072]{0}', space=vmem, size = 0x20000, scoped, tag = 'input window, operand 3']
    #allocation8 [shape = 'u8[40960]{0}', space=vmem, size = 0xa000, scoped, tag = 'input window, operand 4']
    #allocation9 [shape = 's32[2]{0}', space=sflag, size = 0x8, scoped, tag = 'scoped memory for rwkv_v4_forward.2']
    #allocation10 [shape = 'u8[40960]{0}', space=vmem, size = 0xa000, scoped, tag = 'output window, operand 1']
    %12 = vsyncpa [#allocation3], 0
    %s13 = scalar_lea.sflag [#allocation3], 1
    %14 = vsyncpa %s13, 0
    %15 = vsyncpa [#allocation6], 0
    %s16 = scalar_lea.sflag [#allocation6], 1
    %17 = vsyncpa %s16, 0
    %18 = vsyncpa [#allocation9], 0
    %s19 = scalar_lea.sflag [#allocation9], 1
    %20 = vsyncpa %s19, 0
    %21 = vsyncpa [#allocation4], 0
    %s22 = scalar_lea.sflag [#allocation4], 1
    %23 = vsyncpa %s22, 0
    loop: start=0, step=1, limit=6
    $region2: #{rwkv_v4_forward.2} parent=1 // loop_pre_header
      _
    $region3: #{rwkv_v4_forward.2} parent=1 // loop_header
      %s25 = sphi 0, %s29
      %p26 = scmp.ge.s32.totalorder %s25, 6
      %s33 = sphi 0, %s33
      %s35 = sphi 0, %s33
      %s36 = sphi 0, %s35
      %s50 = sphi 0, %s36
      %s56 = sphi 0, %s58
      %s59 = sphi 0, %s56
      %s60 = sphi 0, %s59
      %s76 = sphi 0, %s60
      %s82 = sphi 0, %s84
      %s85 = sphi 0, %s82
      %s86 = sphi 0, %s85
      %s102 = sphi 0, %s86
      %s108 = sphi 0, %s110
      %s111 = sphi 0, %s108
      %s112 = sphi 0, %s111
      %s128 = sphi 0, %s112
      %s134 = sphi 0, %s136
      %s137 = sphi 0, %s134
      %s138 = sphi 0, %s137
      %s154 = sphi 0, %s138
      %s158 = sphi 0, %s158
      %s160 = sphi 0, %s158
      %s161 = sphi 0, %s160
      %s175 = sphi 0, %s161
      %s181 = sphi 0, %s183
      %s184 = sphi 0, %s181
      %s185 = sphi 0, %s184
      %s201 = sphi 0, %s185
    $region4: #{rwkv_v4_forward.2} parent=1 // loop_header_branch
      %28 = sbr.rel (%p26) target = $region8
    $region5: #{rwkv_v4_forward.2} parent=1 // loop_body
      %s30 = ssub.s32 %s25, 1
      %s31 = ssub.s32 %s25, 2
      %s32 = sadd.s32 %s25, 1
      %s34 = sadd.s32 %s33, 1
      %p37 = scmp.eq.s32.totalorder %s25, 3
      %p38 = scmp.ne.s32.totalorder %s33, %s35
      %p39 = scmp.eq.s32.totalorder %s25, 0
      %p40 = por %p38, %p39
      %p41 = scmp.ne.s32.totalorder %s33, %s35
      %p42 = scmp.eq.s32.totalorder %s30, 3
      %p43 = por %p41, %p42
      %p44 = scmp.ne.s32.totalorder %s35, %s36
      %p45 = scmp.eq.s32.totalorder %s30, 0
      %p46 = por %p44, %p45
      %p47 = scmp.ne.s32.totalorder %s35, %s36
      %p48 = scmp.eq.s32.totalorder %s31, 3
      %p49 = por %p47, %p48
      %p51 = scmp.ne.s32.totalorder %s36, %s50
      %p52 = scmp.eq.s32.totalorder %s31, 0
      %p53 = por %p51, %p52
      %s54 = ssub.s32 %s25, %s32
      %p55 = scmp.eq.s32.totalorder %s54, 0
      %s57 = sadd.s32 %s56, 1
      %s58 = scalar_select %p55, %s56, %s57
      %p61 = pneg %p55
      %p62 = scmp.eq.s32.totalorder %s25, 3
      %p63 = por %p61, %p62
      %p64 = scmp.ne.s32.totalorder %s56, %s59
      %p65 = scmp.eq.s32.totalorder %s25, 0
      %p66 = por %p64, %p65
      %p67 = scmp.ne.s32.totalorder %s56, %s59
      %p68 = scmp.eq.s32.totalorder %s30, 3
      %p69 = por %p67, %p68
      %p70 = scmp.ne.s32.totalorder %s59, %s60
      %p71 = scmp.eq.s32.totalorder %s30, 0
      %p72 = por %p70, %p71
      %p73 = scmp.ne.s32.totalorder %s59, %s60
      %p74 = scmp.eq.s32.totalorder %s31, 3
      %p75 = por %p73, %p74
      %p77 = scmp.ne.s32.totalorder %s60, %s76
      %p78 = scmp.eq.s32.totalorder %s31, 0
      %p79 = por %p77, %p78
      %s80 = ssub.s32 %s25, %s32
      %p81 = scmp.eq.s32.totalorder %s80, 0
      %s83 = sadd.s32 %s82, 1
      %s84 = scalar_select %p81, %s82, %s83
      %p87 = pneg %p81
      %p88 = scmp.eq.s32.totalorder %s25, 3
      %p89 = por %p87, %p88
      %p90 = scmp.ne.s32.totalorder %s82, %s85
      %p91 = scmp.eq.s32.totalorder %s25, 0
      %p92 = por %p90, %p91
      %p93 = scmp.ne.s32.totalorder %s82, %s85
      %p94 = scmp.eq.s32.totalorder %s30, 3
      %p95 = por %p93, %p94
      %p96 = scmp.ne.s32.totalorder %s85, %s86
      %p97 = scmp.eq.s32.totalorder %s30, 0
      %p98 = por %p96, %p97
      %p99 = scmp.ne.s32.totalorder %s85, %s86
      %p100 = scmp.eq.s32.totalorder %s31, 3
      %p101 = por %p99, %p100
      %p103 = scmp.ne.s32.totalorder %s86, %s102
      %p104 = scmp.eq.s32.totalorder %s31, 0
      %p105 = por %p103, %p104
      %s106 = ssub.s32 %s25, %s32
      %p107 = scmp.eq.s32.totalorder %s106, 0
      %s109 = sadd.s32 %s108, 1
      %s110 = scalar_select %p107, %s108, %s109
      %p113 = pneg %p107
      %p114 = scmp.eq.s32.totalorder %s25, 3
      %p115 = por %p113, %p114
      %p116 = scmp.ne.s32.totalorder %s108, %s111
      %p117 = scmp.eq.s32.totalorder %s25, 0
      %p118 = por %p116, %p117
      %p119 = scmp.ne.s32.totalorder %s108, %s111
      %p120 = scmp.eq.s32.totalorder %s30, 3
      %p121 = por %p119, %p120
      %p122 = scmp.ne.s32.totalorder %s111, %s112
      %p123 = scmp.eq.s32.totalorder %s30, 0
      %p124 = por %p122, %p123
      %p125 = scmp.ne.s32.totalorder %s111, %s112
      %p126 = scmp.eq.s32.totalorder %s31, 3
      %p127 = por %p125, %p126
      %p129 = scmp.ne.s32.totalorder %s112, %s128
      %p130 = scmp.eq.s32.totalorder %s31, 0
      %p131 = por %p129, %p130
      %s132 = ssub.s32 %s25, %s32
      %p133 = scmp.eq.s32.totalorder %s132, 0
      %s135 = sadd.s32 %s134, 1
      %s136 = scalar_select %p133, %s134, %s135
      %p139 = pneg %p133
      %p140 = scmp.eq.s32.totalorder %s25, 3
      %p141 = por %p139, %p140
      %p142 = scmp.ne.s32.totalorder %s134, %s137
      %p143 = scmp.eq.s32.totalorder %s25, 0
      %p144 = por %p142, %p143
      %p145 = scmp.ne.s32.totalorder %s134, %s137
      %p146 = scmp.eq.s32.totalorder %s30, 3
      %p147 = por %p145, %p146
      %p148 = scmp.ne.s32.totalorder %s137, %s138
      %p149 = scmp.eq.s32.totalorder %s30, 0
      %p150 = por %p148, %p149
      %p151 = scmp.ne.s32.totalorder %s137, %s138
      %p152 = scmp.eq.s32.totalorder %s31, 3
      %p153 = por %p151, %p152
      %p155 = scmp.ne.s32.totalorder %s138, %s154
      %p156 = scmp.eq.s32.totalorder %s31, 0
      %p157 = por %p155, %p156
      %s159 = sadd.s32 %s158, 1
      %p162 = scmp.eq.s32.totalorder %s25, 3
      %p163 = scmp.ne.s32.totalorder %s158, %s160
      %p164 = scmp.eq.s32.totalorder %s25, 0
      %p165 = por %p163, %p164
      %p166 = scmp.ne.s32.totalorder %s158, %s160
      %p167 = scmp.eq.s32.totalorder %s30, 3
      %p168 = por %p166, %p167
      %p169 = scmp.ne.s32.totalorder %s160, %s161
      %p170 = scmp.eq.s32.totalorder %s30, 0
      %p171 = por %p169, %p170
      %p172 = scmp.ne.s32.totalorder %s160, %s161
      %p173 = scmp.eq.s32.totalorder %s31, 3
      %p174 = por %p172, %p173
      %p176 = scmp.ne.s32.totalorder %s161, %s175
      %p177 = scmp.eq.s32.totalorder %s31, 0
      %p178 = por %p176, %p177
      %s179 = ssub.s32 %s25, %s32
      %p180 = scmp.eq.s32.totalorder %s179, 0
      %s182 = sadd.s32 %s181, 1
      %s183 = scalar_select %p180, %s181, %s182
      %p186 = pneg %p180
      %p187 = scmp.eq.s32.totalorder %s25, 3
      %p188 = por %p186, %p187
      %p189 = scmp.ne.s32.totalorder %s181, %s184
      %p190 = scmp.eq.s32.totalorder %s25, 0
      %p191 = por %p189, %p190
      %p192 = scmp.ne.s32.totalorder %s181, %s184
      %p193 = scmp.eq.s32.totalorder %s30, 3
      %p194 = por %p192, %p193
      %p195 = scmp.ne.s32.totalorder %s184, %s185
      %p196 = scmp.eq.s32.totalorder %s30, 0
      %p197 = por %p195, %p196
      %p198 = scmp.ne.s32.totalorder %s184, %s185
      %p199 = scmp.eq.s32.totalorder %s31, 3
      %p200 = por %p198, %p199
      %p202 = scmp.ne.s32.totalorder %s185, %s201
      %p203 = scmp.eq.s32.totalorder %s31, 0
      %p204 = por %p202, %p203
      %p205 = scmp.le.s32.totalorder 1, %s25
      %p206 = scmp.lt.s32.totalorder %s25, 5
      %p207 = pnand %p205, %p206
      %p208 = pneg %p207
      // Predicated region
      $region9: #{rwkv_v4_forward.2} parent=5 // pred_check
        _
      $region10: #{rwkv_v4_forward.2} parent=5 // pred_check_branch
        %210 = sbr.rel (%p207) target = $region12
      $region11: #{rwkv_v4_forward.2} parent=5 // pred_region
        %s211 = ssub.s32 %s25, 1
        // Predicated region
        $region13: #{rwkv_v4_forward.2} parent=11 // pred_check
          %p212 = pneg %p46
        $region14: #{rwkv_v4_forward.2} parent=11 // pred_check_branch
          %214 = sbr.rel (%p212) target = $region16
        $region15: #{rwkv_v4_forward.2} parent=11 // pred_region
          _
        $region16: #{rwkv_v4_forward.2} parent=11 // pred_fallthru
          _
      $region12: #{rwkv_v4_forward.2} parent=5 // pred_fallthru
        _
      %p215 = scmp.lt.s32.totalorder %s25, 4
      // Predicated region
      $region17: #{rwkv_v4_forward.2} parent=5 // pred_check
        %p216 = pneg %p215
      $region18: #{rwkv_v4_forward.2} parent=5 // pred_check_branch
        %218 = sbr.rel (%p216) target = $region20
      $region19: #{rwkv_v4_forward.2} parent=5 // pred_region
        // Predicated region
        $region21: #{rwkv_v4_forward.2} parent=19 // pred_check
          %p219 = pneg %p66
        $region22: #{rwkv_v4_forward.2} parent=19 // pred_check_branch
          %221 = sbr.rel (%p219) target = $region24
        $region23: #{rwkv_v4_forward.2} parent=19 // pred_region
          %s222 = sand.u32 %s56, 1
          %s223 = scalar_lea.sflag [#allocation3], %s222
          %s224 = sand.u32 %s56, 1
          %s225 = smul.addr %s224, 16
          %s226 = scalar_lea.vmem [#allocation2], %s225
          %s228 = ssub.s32 256, 256
          %229 = vsyncadd %s223, %s228
          %s230 = smul.addr %s25, 2
          %s231 = smul.addr %s230, 128
          %s232 = scalar_lea.hbm %s1, %s231
          %s233 = sshll.u32 %s226, 4
          %s234 = int_to_ptr.vmem [resolvable:$true] %s233
          %239 = dma.hbm_to_vmem [thread:$0]  %s232, 256, %s234, %s223, 128, 128, 8
        $region24: #{rwkv_v4_forward.2} parent=19 // pred_fallthru
          _
        // Predicated region
        $region25: #{rwkv_v4_forward.2} parent=19 // pred_check
          %p240 = pneg %p92
        $region26: #{rwkv_v4_forward.2} parent=19 // pred_check_branch
          %242 = sbr.rel (%p240) target = $region28
        $region27: #{rwkv_v4_forward.2} parent=19 // pred_region
          %s243 = sand.u32 %s25, 1
          %s244 = scalar_lea.sflag [#allocation6], %s243
          %s245 = sand.u32 %s82, 1
          %s246 = smul.addr %s245, 448
          %s247 = scalar_lea.vmem [#allocation5], %s246
          %s249 = ssub.s32 7168, 7168
          %250 = vsyncadd %s244, %s249
          %s251 = smul.addr %s25, 112
          %s252 = smul.addr %s251, 64
          %s253 = scalar_lea.hbm %s2, %s252
          %s254 = sshll.u32 %s247, 4
          %s255 = int_to_ptr.vmem [resolvable:$true] %s254
          %260 = dma.hbm_to_vmem [thread:$0]  %s253, 7168, %s255, %s244, 448, 448, 28
        $region28: #{rwkv_v4_forward.2} parent=19 // pred_fallthru
          _
        // Predicated region
        $region29: #{rwkv_v4_forward.2} parent=19 // pred_check
          %p261 = pneg %p118
        $region30: #{rwkv_v4_forward.2} parent=19 // pred_check_branch
          %263 = sbr.rel (%p261) target = $region32
        $region31: #{rwkv_v4_forward.2} parent=19 // pred_region
          %s264 = sand.u32 %s25, 1
          %s265 = scalar_lea.sflag [#allocation6], %s264
          %s266 = sand.u32 %s108, 1
          %s267 = smul.addr %s266, 128
          %s268 = scalar_lea.vmem [#allocation7], %s267
          %s270 = ssub.s32 2048, 2048
          %271 = vsyncadd %s265, %s270
          %s272 = smul.addr %s25, 32
          %s273 = smul.addr %s272, 64
          %s274 = scalar_lea.hbm %s3, %s273
          %s275 = sshll.u32 %s268, 4
          %s276 = int_to_ptr.vmem [resolvable:$true] %s275
          %281 = dma.hbm_to_vmem [thread:$0]  %s274, 2048, %s276, %s265, 64, 64, 4
        $region32: #{rwkv_v4_forward.2} parent=19 // pred_fallthru
          _
        // Predicated region
        $region33: #{rwkv_v4_forward.2} parent=19 // pred_check
          %p282 = pneg %p144
        $region34: #{rwkv_v4_forward.2} parent=19 // pred_check_branch
          %284 = sbr.rel (%p282) target = $region36
        $region35: #{rwkv_v4_forward.2} parent=19 // pred_region
          %s285 = sand.u32 %s134, 1
          %s286 = scalar_lea.sflag [#allocation9], %s285
          %s287 = sand.u32 %s134, 1
          %s288 = smul.addr %s287, 40
          %s289 = scalar_lea.vmem [#allocation8], %s288
          %s291 = ssub.s32 640, 640
          %292 = vsyncadd %s286, %s291
          %s293 = smul.addr %s25, 128
          %s294 = scalar_lea.hbm %s4, %s293
          %s295 = sshll.u32 %s289, 4
          %s296 = int_to_ptr.vmem [resolvable:$true] %s295
          %301 = dma.hbm_to_vmem [thread:$0]  %s294, 640, %s296, %s286, 512, 128, 8
        $region36: #{rwkv_v4_forward.2} parent=19 // pred_fallthru
          _
      $region20: #{rwkv_v4_forward.2} parent=5 // pred_fallthru
        _
      %p302 = scmp.le.s32.totalorder 1, %s25
      %p303 = scmp.lt.s32.totalorder %s25, 5
      %p304 = pnand %p302, %p303
      %p305 = pneg %p304
      // Predicated region
      $region37: #{rwkv_v4_forward.2} parent=5 // pred_check
        _
      $region38: #{rwkv_v4_forward.2} parent=5 // pred_check_branch
        %307 = sbr.rel (%p304) target = $region40
      $region39: #{rwkv_v4_forward.2} parent=5 // pred_region
        %s308 = ssub.s32 %s25, 1
        %s309 = sand.u32 %s59, 1
        %s310 = scalar_lea.sflag [#allocation3], %s309
        %s311 = sand.u32 %s59, 1
        %s312 = smul.addr %s311, 16
        %s313 = scalar_lea.vmem [#allocation2], %s312
        // Predicated region
        $region41: #{rwkv_v4_forward.2} parent=39 // pred_check
          %p314 = pneg %p72
        $region42: #{rwkv_v4_forward.2} parent=39 // pred_check_branch
          %316 = sbr.rel (%p314) target = $region44
        $region43: #{rwkv_v4_forward.2} parent=39 // pred_region
          %317 = dma.done %s310, 256
        $region44: #{rwkv_v4_forward.2} parent=39 // pred_fallthru
          _
        %s318 = sand.u32 %s30, 1
        %s319 = scalar_lea.sflag [#allocation6], %s318
        %s320 = sand.u32 %s85, 1
        %s321 = smul.addr %s320, 448
        %s322 = scalar_lea.vmem [#allocation5], %s321
        // Predicated region
        $region45: #{rwkv_v4_forward.2} parent=39 // pred_check
          %p323 = pneg %p98
        $region46: #{rwkv_v4_forward.2} parent=39 // pred_check_branch
          %325 = sbr.rel (%p323) target = $region48
        $region47: #{rwkv_v4_forward.2} parent=39 // pred_region
          %326 = dma.done %s319, 7168
        $region48: #{rwkv_v4_forward.2} parent=39 // pred_fallthru
          _
        %s327 = sand.u32 %s30, 1
        %s328 = scalar_lea.sflag [#allocation6], %s327
        %s329 = sand.u32 %s111, 1
        %s330 = smul.addr %s329, 128
        %s331 = scalar_lea.vmem [#allocation7], %s330
        // Predicated region
        $region49: #{rwkv_v4_forward.2} parent=39 // pred_check
          %p332 = pneg %p124
        $region50: #{rwkv_v4_forward.2} parent=39 // pred_check_branch
          %334 = sbr.rel (%p332) target = $region52
        $region51: #{rwkv_v4_forward.2} parent=39 // pred_region
          %335 = dma.done %s328, 2048
        $region52: #{rwkv_v4_forward.2} parent=39 // pred_fallthru
          _
        %s336 = sand.u32 %s137, 1
        %s337 = scalar_lea.sflag [#allocation9], %s336
        %s338 = sand.u32 %s137, 1
        %s339 = smul.addr %s338, 40
        %s340 = scalar_lea.vmem [#allocation8], %s339
        // Predicated region
        $region53: #{rwkv_v4_forward.2} parent=39 // pred_check
          %p341 = pneg %p150
        $region54: #{rwkv_v4_forward.2} parent=39 // pred_check_branch
          %343 = sbr.rel (%p341) target = $region56
        $region55: #{rwkv_v4_forward.2} parent=39 // pred_region
          %344 = dma.done %s337, 640
        $region56: #{rwkv_v4_forward.2} parent=39 // pred_fallthru
          _
        %p345 = pneg %p46
        %p346 = pneg %p43
        %s347 = sand.u32 %s59, 1
        %s348 = scalar_lea.sflag [#allocation3], %s347
        %s349 = sand.u32 %s59, 1
        %s350 = smul.addr %s349, 16
        %s351 = scalar_lea.vmem [#allocation2], %s350
        %p352 = pneg %p72
        %p353 = pneg %p69
        %s354 = sand.u32 %s30, 1
        %s355 = scalar_lea.sflag [#allocation6], %s354
        %s356 = sand.u32 %s85, 1
        %s357 = smul.addr %s356, 448
        %s358 = scalar_lea.vmem [#allocation5], %s357
        %p359 = pneg %p98
        %p360 = pneg %p95
        %s361 = sand.u32 %s30, 1
        %s362 = scalar_lea.sflag [#allocation6], %s361
        %s363 = sand.u32 %s111, 1
        %s364 = smul.addr %s363, 128
        %s365 = scalar_lea.vmem [#allocation7], %s364
        %p366 = pneg %p124
        %p367 = pneg %p121
        %s368 = sand.u32 %s137, 1
        %s369 = scalar_lea.sflag [#allocation9], %s368
        %s370 = sand.u32 %s137, 1
        %s371 = smul.addr %s370, 40
        %s372 = scalar_lea.vmem [#allocation8], %s371
        %p373 = pneg %p150
        %p374 = pneg %p147
        %p375 = pneg %p171
        %p376 = pneg %p168
        %p377 = pneg %p197
        %p378 = pneg %p194
        %s379 = sand.u32 %s184, 1
        %s380 = scalar_lea.sflag [#allocation4], %s379
        %s381 = sand.u32 %s184, 1
        %s382 = smul.addr %s381, 40
        %s383 = scalar_lea.vmem [#allocation10], %s382
        %p385 = scmp.eq.s32.totalorder %s30, 0
        // Predicated region
        $region57: #{rwkv_v4_forward.2} parent=39 // pred_check
          %p386 = pneg %p385
        $region58: #{rwkv_v4_forward.2} parent=39 // pred_check_branch
          %388 = sbr.rel (%p386) target = $region60
        $region59: #{rwkv_v4_forward.2} parent=39 // pred_region
          %v389 = vld [vmem:[%s0] sm:$0xff]
          %390 = vst [vmem:[%s5] sm:$0xff] %v389
        $region60: #{rwkv_v4_forward.2} parent=39 // pred_fallthru
          _
        %v391 = vld [vmem:[%s5] sm:$0xff]
        %v392 = vld [vmem:[%s313] sm:$0xff]
        %v393 = vld [vmem:[%s313 + $0x8] sm:$0xff]
        %v394 = vld [vmem:[%s340] sm:$0xff]
        %s395 = scalar_lea.vmem %s340, 8 [#allocation8]
        %v396 = vld [vmem:[%s395] sm:$0xff]
        %s397 = scalar_lea.vmem %s340, 16 [#allocation8]
        %v398 = vld [vmem:[%s397] sm:$0xff]
        %s399 = scalar_lea.vmem %s340, 24 [#allocation8]
        %v400 = vld [vmem:[%s399] sm:$0xff]
        %s401 = scalar_lea.vmem %s340, 32 [#allocation8]
        %v402 = vld [vmem:[%s401] sm:$0xff]
        %403 = vadd.xlane.f32.xlu0 %v391
        %v404 = vpop.xlane.xlu0 %403
        %v405 = vrcp.pop 128.0
        %v406 = vmul.f32 %v404, %v405
        %v407 = vsub.f32 %v391, %v406
        %v408 = vmul.f32 %v407, %v407
        %409 = vadd.xlane.f32.xlu0 %v408
        %v410 = vpop.xlane.xlu0 %409
        %v411 = vmul.f32 %v410, %v405
        %v412 = vadd.f32 %v411, 1e-05
        %v413 = vrsqrt.pop %v412
        %v414 = vmul.f32 %v407, %v413
        %v415 = vlaneseq
        %v416 = vshrl.u32 %v415, 7
        %v417 = vsub.s32 0, %v416
        %v418 = vrot.slane %v392, %v417
        %v419 = vmul.f32 %v414, %v418
        %v420 = vlaneseq
        %v421 = vshrl.u32 %v420, 7
        %v422 = vsub.s32 1, %v421
        %v423 = vrot.slane %v392, %v422
        %v424 = vadd.f32 %v419, %v423
        %v425 = vlaneseq
        %v426 = vshrl.u32 %v425, 7
        %v427 = vsub.s32 6, %v426
        %v428 = vrot.slane %v392, %v427
        %v429 = vmul.f32 %v424, %v428
        %v430 = vsub.f32 1.0, %v392
        %v431 = vlaneseq
        %v432 = vshrl.u32 %v431, 7
        %v433 = vsub.s32 6, %v432
        %v434 = vrot.slane %v430, %v433
        %v435 = vmul.f32 %v400, %v434
        %v436 = vadd.f32 %v429, %v435
        %v437 = vlaneseq
        %v438 = vshrl.u32 %v437, 7
        %v439 = vsub.s32 7, %v438
        %v440 = vrot.slane %v392, %v439
        %v441 = vmul.f32 %v424, %v440
        %v442 = vlaneseq
        %v443 = vshrl.u32 %v442, 7
        %v444 = vsub.s32 7, %v443
        %v445 = vrot.slane %v430, %v444
        %v446 = vmul.f32 %v400, %v445
        %v447 = vadd.f32 %v441, %v446
        %v448 = vlaneseq
        %v449 = vshrl.u32 %v448, 7
        %v450 = vsub.s32 0, %v449
        %v451 = vrot.slane %v393, %v450
        %v452 = vmul.f32 %v424, %v451
        %v453 = vsub.f32 1.0, %v393
        %v454 = vlaneseq
        %v455 = vshrl.u32 %v454, 7
        %v456 = vsub.s32 0, %v455
        %v457 = vrot.slane %v453, %v456
        %v458 = vmul.f32 %v400, %v457
        %v459 = vadd.f32 %v452, %v458
        %v460 = vld [vmem:[%s322] sm:$0xf]
        %v461 = vld [vmem:[%s322 + $0x1c] sm:$0xf]
        %v462 = vld [vmem:[%s322 + $0x38] sm:$0xf]
        %v463 = vld [vmem:[%s322 + $0x54] sm:$0xf]
        %v464 = vld [vmem:[%s322 + $0x70] sm:$0xf]
        %v465 = vld [vmem:[%s322 + $0x8c] sm:$0xf]
        %v466 = vld [vmem:[%s322 + $0xa8] sm:$0xf]
        %v467 = vld [vmem:[%s322 + $0xc4] sm:$0xf]
        %v468 = vld [vmem:[%s322 + $0xe0] sm:$0xf]
        %v469 = vld [vmem:[%s322 + $0xfc] sm:$0xf]
        %v470 = vld [vmem:[%s322 + $0x118] sm:$0xf]
        %v471 = vld [vmem:[%s322 + $0x134] sm:$0xf]
        %v472 = vld [vmem:[%s322 + $0x150] sm:$0xf]
        %v473 = vld [vmem:[%s322 + $0x16c] sm:$0xf]
        %v474 = vld [vmem:[%s322 + $0x188] sm:$0xf]
        %v475 = vld [vmem:[%s322 + $0x1a4] sm:$0xf]
        %v476 = vpack.c.bf16 %v436, %v436
        %v493 = vunpack.c.l.b16 %v460
        %v494 = vunpack.c.l.b16 %v461
        %v495 = vunpack.c.l.b16 %v462
        %v496 = vunpack.c.l.b16 %v463
        %v497 = vunpack.c.l.b16 %v464
        %v498 = vunpack.c.l.b16 %v465
        %v499 = vunpack.c.l.b16 %v466
        %v500 = vunpack.c.l.b16 %v467
        %v501 = vunpack.c.l.b16 %v468
        %v502 = vunpack.c.l.b16 %v469
        %v503 = vunpack.c.l.b16 %v470
        %v504 = vunpack.c.l.b16 %v471
        %v505 = vunpack.c.l.b16 %v472
        %v506 = vunpack.c.l.b16 %v473
        %v507 = vunpack.c.l.b16 %v474
        %v508 = vunpack.c.l.b16 %v475
        %v509 = vpack.c.b16 %v494, %v493
        %v510 = vpack.c.b16 %v496, %v495
        %v511 = vpack.c.b16 %v498, %v497
        %v512 = vpack.c.b16 %v500, %v499
        %v513 = vpack.c.b16 %v502, %v501
        %v514 = vpack.c.b16 %v504, %v503
        %v515 = vpack.c.b16 %v506, %v505
        %v516 = vpack.c.b16 %v508, %v507
        %525 = vmatprep.subr.bf16.mxu0 0
        %526 = vmatpush1.bf16.msra.mxu0 %v509
        %527 = vmatprep.subr.bf16.mxu0 0
        %528 = vmatpush1.bf16.msra.mxu0 %v510
        %529 = vmatprep.subr.bf16.mxu0 0
        %530 = vmatpush1.bf16.msra.mxu0 %v511
        %531 = vmatprep.subr.bf16.mxu0 0
        %532 = vmatpush1.bf16.msra.mxu0 %v512
        %533 = vmatprep.subr.bf16.mxu0 0
        %534 = vmatpush1.bf16.msra.mxu0 %v513
        %535 = vmatprep.subr.bf16.mxu0 0
        %536 = vmatpush1.bf16.msra.mxu0 %v514
        %537 = vmatprep.subr.bf16.mxu0 0
        %538 = vmatpush1.bf16.msra.mxu0 %v515
        %539 = vmatprep.subr.bf16.mxu0 0
        %540 = vmatpush1.bf16.msra.mxu0 %v516
        %541 = vmatprep.subr.bf16.mxu0 0
        %542 = vmatpush1.bf16.msra.mxu0 0
        %543 = vmatprep.subr.bf16.mxu0 0
        %544 = vmatpush1.bf16.msra.mxu0 0
        %545 = vmatprep.subr.bf16.mxu0 0
        %546 = vmatpush1.bf16.msra.mxu0 0
        %547 = vmatprep.subr.bf16.mxu0 0
        %548 = vmatpush1.bf16.msra.mxu0 0
        %549 = vmatprep.subr.bf16.mxu0 0
        %550 = vmatpush1.bf16.msra.mxu0 0
        %551 = vmatprep.subr.bf16.mxu0 0
        %552 = vmatpush1.bf16.msra.mxu0 0
        %553 = vmatprep.subr.bf16.mxu0 0
        %554 = vmatpush1.bf16.msra.mxu0 0
        %555 = vmatprep.subr.bf16.mxu0 0
        %556 = vmatpush1.bf16.msra.mxu0 0
        %557 = vmatprep.mubr.bf16.mxu0 0
        %558 = vmatmul.mubr.bf16.gmra.mrb[0].mxu0 %v476
        %v559 = vpop.f32.mrb[0].mxu0
        %v560 = vadd.f32 0.0, %v559
        %v561 = vpop.f32.mrb[0].mxu0
        %v562 = vpop.f32.mrb[0].mxu0
        %v563 = vpop.f32.mrb[0].mxu0
        %564 = vdwg.mxu0
        %v565 = vld [vmem:[%s322 + $0x4] sm:$0xf]
        %v566 = vld [vmem:[%s322 + $0x20] sm:$0xf]
        %v567 = vld [vmem:[%s322 + $0x3c] sm:$0xf]
        %v568 = vld [vmem:[%s322 + $0x58] sm:$0xf]
        %v569 = vld [vmem:[%s322 + $0x74] sm:$0xf]
        %v570 = vld [vmem:[%s322 + $0x90] sm:$0xf]
        %v571 = vld [vmem:[%s322 + $0xac] sm:$0xf]
        %v572 = vld [vmem:[%s322 + $0xc8] sm:$0xf]
        %v573 = vld [vmem:[%s322 + $0xe4] sm:$0xf]
        %v574 = vld [vmem:[%s322 + $0x100] sm:$0xf]
        %v575 = vld [vmem:[%s322 + $0x11c] sm:$0xf]
        %v576 = vld [vmem:[%s322 + $0x138] sm:$0xf]
        %v577 = vld [vmem:[%s322 + $0x154] sm:$0xf]
        %v578 = vld [vmem:[%s322 + $0x170] sm:$0xf]
        %v579 = vld [vmem:[%s322 + $0x18c] sm:$0xf]
        %v580 = vld [vmem:[%s322 + $0x1a8] sm:$0xf]
        %v581 = vpack.c.bf16 %v447, %v447
        %v598 = vunpack.c.l.b16 %v565
        %v599 = vunpack.c.l.b16 %v566
        %v600 = vunpack.c.l.b16 %v567
        %v601 = vunpack.c.l.b16 %v568
        %v602 = vunpack.c.l.b16 %v569
        %v603 = vunpack.c.l.b16 %v570
        %v604 = vunpack.c.l.b16 %v571
        %v605 = vunpack.c.l.b16 %v572
        %v606 = vunpack.c.l.b16 %v573
        %v607 = vunpack.c.l.b16 %v574
        %v608 = vunpack.c.l.b16 %v575
        %v609 = vunpack.c.l.b16 %v576
        %v610 = vunpack.c.l.b16 %v577
        %v611 = vunpack.c.l.b16 %v578
        %v612 = vunpack.c.l.b16 %v579
        %v613 = vunpack.c.l.b16 %v580
        %v614 = vpack.c.b16 %v599, %v598
        %v615 = vpack.c.b16 %v601, %v600
        %v616 = vpack.c.b16 %v603, %v602
        %v617 = vpack.c.b16 %v605, %v604
        %v618 = vpack.c.b16 %v607, %v606
        %v619 = vpack.c.b16 %v609, %v608
        %v620 = vpack.c.b16 %v611, %v610
        %v621 = vpack.c.b16 %v613, %v612
        %630 = vmatprep.subr.bf16.mxu0 0
        %631 = vmatpush1.bf16.msra.mxu0 %v614
        %632 = vmatprep.subr.bf16.mxu0 0
        %633 = vmatpush1.bf16.msra.mxu0 %v615
        %634 = vmatprep.subr.bf16.mxu0 0
        %635 = vmatpush1.bf16.msra.mxu0 %v616
        %636 = vmatprep.subr.bf16.mxu0 0
        %637 = vmatpush1.bf16.msra.mxu0 %v617
        %638 = vmatprep.subr.bf16.mxu0 0
        %639 = vmatpush1.bf16.msra.mxu0 %v618
        %640 = vmatprep.subr.bf16.mxu0 0
        %641 = vmatpush1.bf16.msra.mxu0 %v619
        %642 = vmatprep.subr.bf16.mxu0 0
        %643 = vmatpush1.bf16.msra.mxu0 %v620
        %644 = vmatprep.subr.bf16.mxu0 0
        %645 = vmatpush1.bf16.msra.mxu0 %v621
        %646 = vmatprep.subr.bf16.mxu0 0
        %647 = vmatpush1.bf16.msra.mxu0 0
        %648 = vmatprep.subr.bf16.mxu0 0
        %649 = vmatpush1.bf16.msra.mxu0 0
        %650 = vmatprep.subr.bf16.mxu0 0
        %651 = vmatpush1.bf16.msra.mxu0 0
        %652 = vmatprep.subr.bf16.mxu0 0
        %653 = vmatpush1.bf16.msra.mxu0 0
        %654 = vmatprep.subr.bf16.mxu0 0
        %655 = vmatpush1.bf16.msra.mxu0 0
        %656 = vmatprep.subr.bf16.mxu0 0
        %657 = vmatpush1.bf16.msra.mxu0 0
        %658 = vmatprep.subr.bf16.mxu0 0
        %659 = vmatpush1.bf16.msra.mxu0 0
        %660 = vmatprep.subr.bf16.mxu0 0
        %661 = vmatpush1.bf16.msra.mxu0 0
        %662 = vmatprep.mubr.bf16.mxu0 0
        %663 = vmatmul.mubr.bf16.gmra.mrb[0].mxu0 %v581
        %v664 = vpop.f32.mrb[0].mxu0
        %v665 = vadd.f32 0.0, %v664
        %v666 = vpop.f32.mrb[0].mxu0
        %v667 = vpop.f32.mrb[0].mxu0
        %v668 = vpop.f32.mrb[0].mxu0
        %669 = vdwg.mxu0
        %v670 = vld [vmem:[%s322 + $0x8] sm:$0xf]
        %v671 = vld [vmem:[%s322 + $0x24] sm:$0xf]
        %v672 = vld [vmem:[%s322 + $0x40] sm:$0xf]
        %v673 = vld [vmem:[%s322 + $0x5c] sm:$0xf]
        %v674 = vld [vmem:[%s322 + $0x78] sm:$0xf]
        %v675 = vld [vmem:[%s322 + $0x94] sm:$0xf]
        %v676 = vld [vmem:[%s322 + $0xb0] sm:$0xf]
        %v677 = vld [vmem:[%s322 + $0xcc] sm:$0xf]
        %v678 = vld [vmem:[%s322 + $0xe8] sm:$0xf]
        %v679 = vld [vmem:[%s322 + $0x104] sm:$0xf]
        %v680 = vld [vmem:[%s322 + $0x120] sm:$0xf]
        %v681 = vld [vmem:[%s322 + $0x13c] sm:$0xf]
        %v682 = vld [vmem:[%s322 + $0x158] sm:$0xf]
        %v683 = vld [vmem:[%s322 + $0x174] sm:$0xf]
        %v684 = vld [vmem:[%s322 + $0x190] sm:$0xf]
        %v685 = vld [vmem:[%s322 + $0x1ac] sm:$0xf]
        %v686 = vpack.c.bf16 %v459, %v459
        %v703 = vunpack.c.l.b16 %v670
        %v704 = vunpack.c.l.b16 %v671
        %v705 = vunpack.c.l.b16 %v672
        %v706 = vunpack.c.l.b16 %v673
        %v707 = vunpack.c.l.b16 %v674
        %v708 = vunpack.c.l.b16 %v675
        %v709 = vunpack.c.l.b16 %v676
        %v710 = vunpack.c.l.b16 %v677
        %v711 = vunpack.c.l.b16 %v678
        %v712 = vunpack.c.l.b16 %v679
        %v713 = vunpack.c.l.b16 %v680
        %v714 = vunpack.c.l.b16 %v681
        %v715 = vunpack.c.l.b16 %v682
        %v716 = vunpack.c.l.b16 %v683
        %v717 = vunpack.c.l.b16 %v684
        %v718 = vunpack.c.l.b16 %v685
        %v719 = vpack.c.b16 %v704, %v703
        %v720 = vpack.c.b16 %v706, %v705
        %v721 = vpack.c.b16 %v708, %v707
        %v722 = vpack.c.b16 %v710, %v709
        %v723 = vpack.c.b16 %v712, %v711
        %v724 = vpack.c.b16 %v714, %v713
        %v725 = vpack.c.b16 %v716, %v715
        %v726 = vpack.c.b16 %v718, %v717
        %735 = vmatprep.subr.bf16.mxu0 0
        %736 = vmatpush1.bf16.msra.mxu0 %v719
        %737 = vmatprep.subr.bf16.mxu0 0
        %738 = vmatpush1.bf16.msra.mxu0 %v720
        %739 = vmatprep.subr.bf16.mxu0 0
        %740 = vmatpush1.bf16.msra.mxu0 %v721
        %741 = vmatprep.subr.bf16.mxu0 0
        %742 = vmatpush1.bf16.msra.mxu0 %v722
        %743 = vmatprep.subr.bf16.mxu0 0
        %744 = vmatpush1.bf16.msra.mxu0 %v723
        %745 = vmatprep.subr.bf16.mxu0 0
        %746 = vmatpush1.bf16.msra.mxu0 %v724
        %747 = vmatprep.subr.bf16.mxu0 0
        %748 = vmatpush1.bf16.msra.mxu0 %v725
        %749 = vmatprep.subr.bf16.mxu0 0
        %750 = vmatpush1.bf16.msra.mxu0 %v726
        %751 = vmatprep.subr.bf16.mxu0 0
        %752 = vmatpush1.bf16.msra.mxu0 0
        %753 = vmatprep.subr.bf16.mxu0 0
        %754 = vmatpush1.bf16.msra.mxu0 0
        %755 = vmatprep.subr.bf16.mxu0 0
        %756 = vmatpush1.bf16.msra.mxu0 0
        %757 = vmatprep.subr.bf16.mxu0 0
        %758 = vmatpush1.bf16.msra.mxu0 0
        %759 = vmatprep.subr.bf16.mxu0 0
        %760 = vmatpush1.bf16.msra.mxu0 0
        %761 = vmatprep.subr.bf16.mxu0 0
        %762 = vmatpush1.bf16.msra.mxu0 0
        %763 = vmatprep.subr.bf16.mxu0 0
        %764 = vmatpush1.bf16.msra.mxu0 0
        %765 = vmatprep.subr.bf16.mxu0 0
        %766 = vmatpush1.bf16.msra.mxu0 0
        %767 = vmatprep.mubr.bf16.mxu0 0
        %768 = vmatmul.mubr.bf16.gmra.mrb[0].mxu0 %v686
        %v769 = vpop.f32.mrb[0].mxu0
        %v770 = vadd.f32 0.0, %v769
        %v771 = vpop.f32.mrb[0].mxu0
        %v772 = vpop.f32.mrb[0].mxu0
        %v773 = vpop.f32.mrb[0].mxu0
        %774 = vdwg.mxu0
        %v775 = vxor.u32 %v770, 2147483648
        %v776 = vmul.f32 %v775, 1.442695
        %v777 = vpow.pop %v776
        %v778 = vadd.f32 %v777, 1.0
        %v779 = vrcp.pop %v778
        %v780 = vmul.f32 1.0, %v779
        %v781 = vlaneseq
        %v782 = vshrl.u32 %v781, 7
        %v783 = vsub.s32 5, %v782
        %v784 = vrot.slane %v392, %v783
        %v785 = vadd.f32 %v784, %v560
        %v786 = vmax.f32 %v398, %v785
        %v787 = vsub.f32 %v398, %v786
        %v788 = vmul.f32 %v787, 1.442695
        %v789 = vpow.pop %v788
        %v790 = vsub.f32 %v785, %v786
        %v791 = vmul.f32 %v790, 1.442695
        %v792 = vpow.pop %v791
        %v793 = vmul.f32 %v789, %v394
        %v794 = vmul.f32 %v792, %v665
        %v795 = vadd.f32 %v793, %v794
        %v796 = vmul.f32 %v789, %v396
        %v797 = vadd.f32 %v796, %v792
        %v798 = vmul.f32 %v392, 1.442695
        %v799 = vpow.pop %v798
        %v800 = vlaneseq
        %v801 = vshrl.u32 %v800, 7
        %v802 = vsub.s32 4, %v801
        %v803 = vrot.slane %v799, %v802
        %v804 = vsub.f32 %v398, %v803
        %v805 = vmax.f32 %v804, %v560
        %v806 = vsub.f32 %v804, %v805
        %v807 = vmul.f32 %v806, 1.442695
        %v808 = vpow.pop %v807
        %v809 = vsub.f32 %v560, %v805
        %v810 = vmul.f32 %v809, 1.442695
        %v811 = vpow.pop %v810
        %v812 = vmul.f32 %v780, %v795
        %v813 = vrcp.pop %v797
        %v814 = vmul.f32 %v812, %v813
        %v815 = vld [vmem:[%s322 + $0xc] sm:$0xf]
        %v816 = vld [vmem:[%s322 + $0x28] sm:$0xf]
        %v817 = vld [vmem:[%s322 + $0x44] sm:$0xf]
        %v818 = vld [vmem:[%s322 + $0x60] sm:$0xf]
        %v819 = vld [vmem:[%s322 + $0x7c] sm:$0xf]
        %v820 = vld [vmem:[%s322 + $0x98] sm:$0xf]
        %v821 = vld [vmem:[%s322 + $0xb4] sm:$0xf]
        %v822 = vld [vmem:[%s322 + $0xd0] sm:$0xf]
        %v823 = vld [vmem:[%s322 + $0xec] sm:$0xf]
        %v824 = vld [vmem:[%s322 + $0x108] sm:$0xf]
        %v825 = vld [vmem:[%s322 + $0x124] sm:$0xf]
        %v826 = vld [vmem:[%s322 + $0x140] sm:$0xf]
        %v827 = vld [vmem:[%s322 + $0x15c] sm:$0xf]
        %v828 = vld [vmem:[%s322 + $0x178] sm:$0xf]
        %v829 = vld [vmem:[%s322 + $0x194] sm:$0xf]
        %v830 = vld [vmem:[%s322 + $0x1b0] sm:$0xf]
        %v831 = vpack.c.bf16 %v814, %v814
        %v848 = vunpack.c.l.b16 %v815
        %v849 = vunpack.c.l.b16 %v816
        %v850 = vunpack.c.l.b16 %v817
        %v851 = vunpack.c.l.b16 %v818
        %v852 = vunpack.c.l.b16 %v819
        %v853 = vunpack.c.l.b16 %v820
        %v854 = vunpack.c.l.b16 %v821
        %v855 = vunpack.c.l.b16 %v822
        %v856 = vunpack.c.l.b16 %v823
        %v857 = vunpack.c.l.b16 %v824
        %v858 = vunpack.c.l.b16 %v825
        %v859 = vunpack.c.l.b16 %v826
        %v860 = vunpack.c.l.b16 %v827
        %v861 = vunpack.c.l.b16 %v828
        %v862 = vunpack.c.l.b16 %v829
        %v863 = vunpack.c.l.b16 %v830
        %v864 = vpack.c.b16 %v849, %v848
        %v865 = vpack.c.b16 %v851, %v850
        %v866 = vpack.c.b16 %v853, %v852
        %v867 = vpack.c.b16 %v855, %v854
        %v868 = vpack.c.b16 %v857, %v856
        %v869 = vpack.c.b16 %v859, %v858
        %v870 = vpack.c.b16 %v861, %v860
        %v871 = vpack.c.b16 %v863, %v862
        %880 = vmatprep.subr.bf16.mxu0 0
        %881 = vmatpush1.bf16.msra.mxu0 %v864
        %882 = vmatprep.subr.bf16.mxu0 0
        %883 = vmatpush1.bf16.msra.mxu0 %v865
        %884 = vmatprep.subr.bf16.mxu0 0
        %885 = vmatpush1.bf16.msra.mxu0 %v866
        %886 = vmatprep.subr.bf16.mxu0 0
        %887 = vmatpush1.bf16.msra.mxu0 %v867
        %888 = vmatprep.subr.bf16.mxu0 0
        %889 = vmatpush1.bf16.msra.mxu0 %v868
        %890 = vmatprep.subr.bf16.mxu0 0
        %891 = vmatpush1.bf16.msra.mxu0 %v869
        %892 = vmatprep.subr.bf16.mxu0 0
        %893 = vmatpush1.bf16.msra.mxu0 %v870
        %894 = vmatprep.subr.bf16.mxu0 0
        %895 = vmatpush1.bf16.msra.mxu0 %v871
        %896 = vmatprep.subr.bf16.mxu0 0
        %897 = vmatpush1.bf16.msra.mxu0 0
        %898 = vmatprep.subr.bf16.mxu0 0
        %899 = vmatpush1.bf16.msra.mxu0 0
        %900 = vmatprep.subr.bf16.mxu0 0
        %901 = vmatpush1.bf16.msra.mxu0 0
        %902 = vmatprep.subr.bf16.mxu0 0
        %903 = vmatpush1.bf16.msra.mxu0 0
        %904 = vmatprep.subr.bf16.mxu0 0
        %905 = vmatpush1.bf16.msra.mxu0 0
        %906 = vmatprep.subr.bf16.mxu0 0
        %907 = vmatpush1.bf16.msra.mxu0 0
        %908 = vmatprep.subr.bf16.mxu0 0
        %909 = vmatpush1.bf16.msra.mxu0 0
        %910 = vmatprep.subr.bf16.mxu0 0
        %911 = vmatpush1.bf16.msra.mxu0 0
        %912 = vmatprep.mubr.bf16.mxu0 0
        %913 = vmatmul.mubr.bf16.gmra.mrb[0].mxu0 %v831
        %v914 = vpop.f32.mrb[0].mxu0
        %v915 = vadd.f32 0.0, %v914
        %v916 = vpop.f32.mrb[0].mxu0
        %v917 = vpop.f32.mrb[0].mxu0
        %v918 = vpop.f32.mrb[0].mxu0
        %919 = vdwg.mxu0
        %v920 = vadd.f32 %v391, %v915
        %921 = vadd.xlane.f32.xlu0 %v920
        %v922 = vpop.xlane.xlu0 %921
        %v923 = vmul.f32 %v922, %v405
        %v924 = vsub.f32 %v920, %v923
        %v925 = vmul.f32 %v924, %v924
        %926 = vadd.xlane.f32.xlu0 %v925
        %v927 = vpop.xlane.xlu0 %926
        %v928 = vmul.f32 %v927, %v405
        %v929 = vadd.f32 %v928, 1e-05
        %v930 = vrsqrt.pop %v929
        %v931 = vmul.f32 %v924, %v930
        %v932 = vlaneseq
        %v933 = vshrl.u32 %v932, 7
        %v934 = vsub.s32 2, %v933
        %v935 = vrot.slane %v392, %v934
        %v936 = vmul.f32 %v931, %v935
        %v937 = vlaneseq
        %v938 = vshrl.u32 %v937, 7
        %v939 = vsub.s32 3, %v938
        %v940 = vrot.slane %v392, %v939
        %v941 = vadd.f32 %v936, %v940
        %v942 = vlaneseq
        %v943 = vshrl.u32 %v942, 7
        %v944 = vsub.s32 1, %v943
        %v945 = vrot.slane %v393, %v944
        %v946 = vmul.f32 %v941, %v945
        %v947 = vlaneseq
        %v948 = vshrl.u32 %v947, 7
        %v949 = vsub.s32 1, %v948
        %v950 = vrot.slane %v453, %v949
        %v951 = vmul.f32 %v402, %v950
        %v952 = vadd.f32 %v946, %v951
        %v953 = vlaneseq
        %v954 = vshrl.u32 %v953, 7
        %v955 = vsub.s32 2, %v954
        %v956 = vrot.slane %v393, %v955
        %v957 = vmul.f32 %v941, %v956
        %v958 = vlaneseq
        %v959 = vshrl.u32 %v958, 7
        %v960 = vsub.s32 2, %v959
        %v961 = vrot.slane %v453, %v960
        %v962 = vmul.f32 %v402, %v961
        %v963 = vadd.f32 %v957, %v962
        %v964 = vld [vmem:[%s322 + $0x18] sm:$0xf]
        %v965 = vld [vmem:[%s322 + $0x34] sm:$0xf]
        %v966 = vld [vmem:[%s322 + $0x50] sm:$0xf]
        %v967 = vld [vmem:[%s322 + $0x6c] sm:$0xf]
        %v968 = vld [vmem:[%s322 + $0x88] sm:$0xf]
        %v969 = vld [vmem:[%s322 + $0xa4] sm:$0xf]
        %v970 = vld [vmem:[%s322 + $0xc0] sm:$0xf]
        %v971 = vld [vmem:[%s322 + $0xdc] sm:$0xf]
        %v972 = vld [vmem:[%s322 + $0xf8] sm:$0xf]
        %v973 = vld [vmem:[%s322 + $0x114] sm:$0xf]
        %v974 = vld [vmem:[%s322 + $0x130] sm:$0xf]
        %v975 = vld [vmem:[%s322 + $0x14c] sm:$0xf]
        %v976 = vld [vmem:[%s322 + $0x168] sm:$0xf]
        %v977 = vld [vmem:[%s322 + $0x184] sm:$0xf]
        %v978 = vld [vmem:[%s322 + $0x1a0] sm:$0xf]
        %v979 = vld [vmem:[%s322 + $0x1bc] sm:$0xf]
        %v980 = vpack.c.bf16 %v963, %v963
        %v997 = vunpack.c.l.b16 %v964
        %v998 = vunpack.c.l.b16 %v965
        %v999 = vunpack.c.l.b16 %v966
        %v1000 = vunpack.c.l.b16 %v967
        %v1001 = vunpack.c.l.b16 %v968
        %v1002 = vunpack.c.l.b16 %v969
        %v1003 = vunpack.c.l.b16 %v970
        %v1004 = vunpack.c.l.b16 %v971
        %v1005 = vunpack.c.l.b16 %v972
        %v1006 = vunpack.c.l.b16 %v973
        %v1007 = vunpack.c.l.b16 %v974
        %v1008 = vunpack.c.l.b16 %v975
        %v1009 = vunpack.c.l.b16 %v976
        %v1010 = vunpack.c.l.b16 %v977
        %v1011 = vunpack.c.l.b16 %v978
        %v1012 = vunpack.c.l.b16 %v979
        %v1013 = vpack.c.b16 %v998, %v997
        %v1014 = vpack.c.b16 %v1000, %v999
        %v1015 = vpack.c.b16 %v1002, %v1001
        %v1016 = vpack.c.b16 %v1004, %v1003
        %v1017 = vpack.c.b16 %v1006, %v1005
        %v1018 = vpack.c.b16 %v1008, %v1007
        %v1019 = vpack.c.b16 %v1010, %v1009
        %v1020 = vpack.c.b16 %v1012, %v1011
        %1029 = vmatprep.subr.bf16.mxu0 0
        %1030 = vmatpush1.bf16.msra.mxu0 %v1013
        %1031 = vmatprep.subr.bf16.mxu0 0
        %1032 = vmatpush1.bf16.msra.mxu0 %v1014
        %1033 = vmatprep.subr.bf16.mxu0 0
        %1034 = vmatpush1.bf16.msra.mxu0 %v1015
        %1035 = vmatprep.subr.bf16.mxu0 0
        %1036 = vmatpush1.bf16.msra.mxu0 %v1016
        %1037 = vmatprep.subr.bf16.mxu0 0
        %1038 = vmatpush1.bf16.msra.mxu0 %v1017
        %1039 = vmatprep.subr.bf16.mxu0 0
        %1040 = vmatpush1.bf16.msra.mxu0 %v1018
        %1041 = vmatprep.subr.bf16.mxu0 0
        %1042 = vmatpush1.bf16.msra.mxu0 %v1019
        %1043 = vmatprep.subr.bf16.mxu0 0
        %1044 = vmatpush1.bf16.msra.mxu0 %v1020
        %1045 = vmatprep.subr.bf16.mxu0 0
        %1046 = vmatpush1.bf16.msra.mxu0 0
        %1047 = vmatprep.subr.bf16.mxu0 0
        %1048 = vmatpush1.bf16.msra.mxu0 0
        %1049 = vmatprep.subr.bf16.mxu0 0
        %1050 = vmatpush1.bf16.msra.mxu0 0
        %1051 = vmatprep.subr.bf16.mxu0 0
        %1052 = vmatpush1.bf16.msra.mxu0 0
        %1053 = vmatprep.subr.bf16.mxu0 0
        %1054 = vmatpush1.bf16.msra.mxu0 0
        %1055 = vmatprep.subr.bf16.mxu0 0
        %1056 = vmatpush1.bf16.msra.mxu0 0
        %1057 = vmatprep.subr.bf16.mxu0 0
        %1058 = vmatpush1.bf16.msra.mxu0 0
        %1059 = vmatprep.subr.bf16.mxu0 0
        %1060 = vmatpush1.bf16.msra.mxu0 0
        %1061 = vmatprep.mubr.bf16.mxu0 0
        %1062 = vmatmul.mubr.bf16.gmra.mrb[0].mxu0 %v980
        %v1063 = vpop.f32.mrb[0].mxu0
        %v1064 = vadd.f32 0.0, %v1063
        %v1065 = vpop.f32.mrb[0].mxu0
        %v1066 = vpop.f32.mrb[0].mxu0
        %v1067 = vpop.f32.mrb[0].mxu0
        %1068 = vdwg.mxu0
        %v1069 = vxor.u32 %v1064, 2147483648
        %v1070 = vmul.f32 %v1069, 1.442695
        %v1071 = vpow.pop %v1070
        %v1072 = vadd.f32 %v1071, 1.0
        %v1073 = vrcp.pop %v1072
        %v1074 = vmul.f32 1.0, %v1073
        %v1075 = vld [vmem:[%s322 + $0x10] sm:$0xff]
        %v1076 = vld [vmem:[%s322 + $0x2c] sm:$0xff]
        %v1077 = vld [vmem:[%s322 + $0x48] sm:$0xff]
        %v1078 = vld [vmem:[%s322 + $0x64] sm:$0xff]
        %v1079 = vld [vmem:[%s322 + $0x80] sm:$0xff]
        %v1080 = vld [vmem:[%s322 + $0x9c] sm:$0xff]
        %v1081 = vld [vmem:[%s322 + $0xb8] sm:$0xff]
        %v1082 = vld [vmem:[%s322 + $0xd4] sm:$0xff]
        %v1083 = vld [vmem:[%s322 + $0xf0] sm:$0xff]
        %v1084 = vld [vmem:[%s322 + $0x10c] sm:$0xff]
        %v1085 = vld [vmem:[%s322 + $0x128] sm:$0xff]
        %v1086 = vld [vmem:[%s322 + $0x144] sm:$0xff]
        %v1087 = vld [vmem:[%s322 + $0x160] sm:$0xff]
        %v1088 = vld [vmem:[%s322 + $0x17c] sm:$0xff]
        %v1089 = vld [vmem:[%s322 + $0x198] sm:$0xff]
        %v1090 = vld [vmem:[%s322 + $0x1b4] sm:$0xff]
        %v1091 = vpack.c.bf16 %v952, %v952
        %v1108 = vunpack.c.l.b16 %v1075
        %v1109 = vunpack.c.h.b16 %v1075
        %v1110 = vunpack.c.l.b16 %v1076
        %v1111 = vunpack.c.h.b16 %v1076
        %v1112 = vunpack.c.l.b16 %v1077
        %v1113 = vunpack.c.h.b16 %v1077
        %v1114 = vunpack.c.l.b16 %v1078
        %v1115 = vunpack.c.h.b16 %v1078
        %v1116 = vunpack.c.l.b16 %v1079
        %v1117 = vunpack.c.h.b16 %v1079
        %v1118 = vunpack.c.l.b16 %v1080
        %v1119 = vunpack.c.h.b16 %v1080
        %v1120 = vunpack.c.l.b16 %v1081
        %v1121 = vunpack.c.h.b16 %v1081
        %v1122 = vunpack.c.l.b16 %v1082
        %v1123 = vunpack.c.h.b16 %v1082
        %v1124 = vunpack.c.l.b16 %v1083
        %v1125 = vunpack.c.h.b16 %v1083
        %v1126 = vunpack.c.l.b16 %v1084
        %v1127 = vunpack.c.h.b16 %v1084
        %v1128 = vunpack.c.l.b16 %v1085
        %v1129 = vunpack.c.h.b16 %v1085
        %v1130 = vunpack.c.l.b16 %v1086
        %v1131 = vunpack.c.h.b16 %v1086
        %v1132 = vunpack.c.l.b16 %v1087
        %v1133 = vunpack.c.h.b16 %v1087
        %v1134 = vunpack.c.l.b16 %v1088
        %v1135 = vunpack.c.h.b16 %v1088
        %v1136 = vunpack.c.l.b16 %v1089
        %v1137 = vunpack.c.h.b16 %v1089
        %v1138 = vunpack.c.l.b16 %v1090
        %v1139 = vunpack.c.h.b16 %v1090
        %v1140 = vpack.c.b16 %v1110, %v1108
        %v1141 = vpack.c.b16 %v1111, %v1109
        %v1142 = vpack.c.b16 %v1114, %v1112
        %v1143 = vpack.c.b16 %v1115, %v1113
        %v1144 = vpack.c.b16 %v1118, %v1116
        %v1145 = vpack.c.b16 %v1119, %v1117
        %v1146 = vpack.c.b16 %v1122, %v1120
        %v1147 = vpack.c.b16 %v1123, %v1121
        %v1148 = vpack.c.b16 %v1126, %v1124
        %v1149 = vpack.c.b16 %v1127, %v1125
        %v1150 = vpack.c.b16 %v1130, %v1128
        %v1151 = vpack.c.b16 %v1131, %v1129
        %v1152 = vpack.c.b16 %v1134, %v1132
        %v1153 = vpack.c.b16 %v1135, %v1133
        %v1154 = vpack.c.b16 %v1138, %v1136
        %v1155 = vpack.c.b16 %v1139, %v1137
        %1172 = vmatprep.subr.bf16.mxu0 %v1141
        %1173 = vmatpush1.bf16.msra.mxu0 %v1140
        %1174 = vmatprep.subr.bf16.mxu0 %v1143
        %1175 = vmatpush1.bf16.msra.mxu0 %v1142
        %1176 = vmatprep.subr.bf16.mxu0 %v1145
        %1177 = vmatpush1.bf16.msra.mxu0 %v1144
        %1178 = vmatprep.subr.bf16.mxu0 %v1147
        %1179 = vmatpush1.bf16.msra.mxu0 %v1146
        %1180 = vmatprep.subr.bf16.mxu0 %v1149
        %1181 = vmatpush1.bf16.msra.mxu0 %v1148
        %1182 = vmatprep.subr.bf16.mxu0 %v1151
        %1183 = vmatpush1.bf16.msra.mxu0 %v1150
        %1184 = vmatprep.subr.bf16.mxu0 %v1153
        %1185 = vmatpush1.bf16.msra.mxu0 %v1152
        %1186 = vmatprep.subr.bf16.mxu0 %v1155
        %1187 = vmatpush1.bf16.msra.mxu0 %v1154
        %1188 = vmatprep.subr.bf16.mxu0 0
        %1189 = vmatpush1.bf16.msra.mxu0 0
        %1190 = vmatprep.subr.bf16.mxu0 0
        %1191 = vmatpush1.bf16.msra.mxu0 0
        %1192 = vmatprep.subr.bf16.mxu0 0
        %1193 = vmatpush1.bf16.msra.mxu0 0
        %1194 = vmatprep.subr.bf16.mxu0 0
        %1195 = vmatpush1.bf16.msra.mxu0 0
        %1196 = vmatprep.subr.bf16.mxu0 0
        %1197 = vmatpush1.bf16.msra.mxu0 0
        %1198 = vmatprep.subr.bf16.mxu0 0
        %1199 = vmatpush1.bf16.msra.mxu0 0
        %1200 = vmatprep.subr.bf16.mxu0 0
        %1201 = vmatpush1.bf16.msra.mxu0 0
        %1202 = vmatprep.subr.bf16.mxu0 0
        %1203 = vmatpush1.bf16.msra.mxu0 0
        %1204 = vmatprep.mubr.bf16.mxu0 0
        %1205 = vmatmul.mubr.bf16.gmra.mrb[0].mxu0 %v1091
        %v1206 = vpop.f32.mrb[0].mxu0
        %v1207 = vadd.f32 0.0, %v1206
        %v1208 = vpop.f32.mrb[0].mxu0
        %v1209 = vadd.f32 0.0, %v1208
        %v1210 = vpop.f32.mrb[0].mxu0
        %v1211 = vpop.f32.mrb[0].mxu0
        %1212 = vdwg.mxu0
        %v1213 = vmax.f32 %v1207, 0.0
        %v1214 = vmax.f32 %v1209, 0.0
        %v1215 = vmul.f32 %v1213, %v1213
        %v1216 = vmul.f32 %v1214, %v1214
        %v1217 = vld [vmem:[%s331] sm:$0xf]
        %v1218 = vld [vmem:[%s331 + $0x4] sm:$0xf]
        %v1219 = vld [vmem:[%s331 + $0x8] sm:$0xf]
        %v1220 = vld [vmem:[%s331 + $0xc] sm:$0xf]
        %v1221 = vld [vmem:[%s331 + $0x10] sm:$0xf]
        %v1222 = vld [vmem:[%s331 + $0x14] sm:$0xf]
        %v1223 = vld [vmem:[%s331 + $0x18] sm:$0xf]
        %v1224 = vld [vmem:[%s331 + $0x1c] sm:$0xf]
        %v1225 = vld [vmem:[%s331 + $0x20] sm:$0xf]
        %v1226 = vld [vmem:[%s331 + $0x24] sm:$0xf]
        %v1227 = vld [vmem:[%s331 + $0x28] sm:$0xf]
        %v1228 = vld [vmem:[%s331 + $0x2c] sm:$0xf]
        %v1229 = vld [vmem:[%s331 + $0x30] sm:$0xf]
        %v1230 = vld [vmem:[%s331 + $0x34] sm:$0xf]
        %v1231 = vld [vmem:[%s331 + $0x38] sm:$0xf]
        %v1232 = vld [vmem:[%s331 + $0x3c] sm:$0xf]
        %v1233 = vld [vmem:[%s331 + $0x40] sm:$0xf]
        %v1234 = vld [vmem:[%s331 + $0x44] sm:$0xf]
        %v1235 = vld [vmem:[%s331 + $0x48] sm:$0xf]
        %v1236 = vld [vmem:[%s331 + $0x4c] sm:$0xf]
        %v1237 = vld [vmem:[%s331 + $0x50] sm:$0xf]
        %v1238 = vld [vmem:[%s331 + $0x54] sm:$0xf]
        %v1239 = vld [vmem:[%s331 + $0x58] sm:$0xf]
        %v1240 = vld [vmem:[%s331 + $0x5c] sm:$0xf]
        %v1241 = vld [vmem:[%s331 + $0x60] sm:$0xf]
        %v1242 = vld [vmem:[%s331 + $0x64] sm:$0xf]
        %v1243 = vld [vmem:[%s331 + $0x68] sm:$0xf]
        %v1244 = vld [vmem:[%s331 + $0x6c] sm:$0xf]
        %v1245 = vld [vmem:[%s331 + $0x70] sm:$0xf]
        %v1246 = vld [vmem:[%s331 + $0x74] sm:$0xf]
        %v1247 = vld [vmem:[%s331 + $0x78] sm:$0xf]
        %v1248 = vld [vmem:[%s331 + $0x7c] sm:$0xf]
        %v1249 = vpack.c.bf16 %v1215, %v1215
        %v1250 = vpack.c.bf16 %v1216, %v1216
        %v1283 = vunpack.c.l.b16 %v1217
        %v1284 = vunpack.c.l.b16 %v1218
        %v1285 = vunpack.c.l.b16 %v1219
        %v1286 = vunpack.c.l.b16 %v1220
        %v1287 = vunpack.c.l.b16 %v1221
        %v1288 = vunpack.c.l.b16 %v1222
        %v1289 = vunpack.c.l.b16 %v1223
        %v1290 = vunpack.c.l.b16 %v1224
        %v1291 = vunpack.c.l.b16 %v1225
        %v1292 = vunpack.c.l.b16 %v1226
        %v1293 = vunpack.c.l.b16 %v1227
        %v1294 = vunpack.c.l.b16 %v1228
        %v1295 = vunpack.c.l.b16 %v1229
        %v1296 = vunpack.c.l.b16 %v1230
        %v1297 = vunpack.c.l.b16 %v1231
        %v1298 = vunpack.c.l.b16 %v1232
        %v1299 = vunpack.c.l.b16 %v1233
        %v1300 = vunpack.c.l.b16 %v1234
        %v1301 = vunpack.c.l.b16 %v1235
        %v1302 = vunpack.c.l.b16 %v1236
        %v1303 = vunpack.c.l.b16 %v1237
        %v1304 = vunpack.c.l.b16 %v1238
        %v1305 = vunpack.c.l.b16 %v1239
        %v1306 = vunpack.c.l.b16 %v1240
        %v1307 = vunpack.c.l.b16 %v1241
        %v1308 = vunpack.c.l.b16 %v1242
        %v1309 = vunpack.c.l.b16 %v1243
        %v1310 = vunpack.c.l.b16 %v1244
        %v1311 = vunpack.c.l.b16 %v1245
        %v1312 = vunpack.c.l.b16 %v1246
        %v1313 = vunpack.c.l.b16 %v1247
        %v1314 = vunpack.c.l.b16 %v1248
        %v1315 = vpack.c.b16 %v1284, %v1283
        %v1316 = vpack.c.b16 %v1286, %v1285
        %v1317 = vpack.c.b16 %v1288, %v1287
        %v1318 = vpack.c.b16 %v1290, %v1289
        %v1319 = vpack.c.b16 %v1292, %v1291
        %v1320 = vpack.c.b16 %v1294, %v1293
        %v1321 = vpack.c.b16 %v1296, %v1295
        %v1322 = vpack.c.b16 %v1298, %v1297
        %v1323 = vpack.c.b16 %v1300, %v1299
        %v1324 = vpack.c.b16 %v1302, %v1301
        %v1325 = vpack.c.b16 %v1304, %v1303
        %v1326 = vpack.c.b16 %v1306, %v1305
        %v1327 = vpack.c.b16 %v1308, %v1307
        %v1328 = vpack.c.b16 %v1310, %v1309
        %v1329 = vpack.c.b16 %v1312, %v1311
        %v1330 = vpack.c.b16 %v1314, %v1313
        %1347 = vmatprep.subr.bf16.mxu0 0
        %1348 = vmatpush1.bf16.msra.mxu0 %v1315
        %1349 = vmatprep.subr.bf16.mxu0 0
        %1350 = vmatpush1.bf16.msra.mxu0 %v1316
        %1351 = vmatprep.subr.bf16.mxu0 0
        %1352 = vmatpush1.bf16.msra.mxu0 %v1317
        %1353 = vmatprep.subr.bf16.mxu0 0
        %1354 = vmatpush1.bf16.msra.mxu0 %v1318
        %1355 = vmatprep.subr.bf16.mxu0 0
        %1356 = vmatpush1.bf16.msra.mxu0 %v1319
        %1357 = vmatprep.subr.bf16.mxu0 0
        %1358 = vmatpush1.bf16.msra.mxu0 %v1320
        %1359 = vmatprep.subr.bf16.mxu0 0
        %1360 = vmatpush1.bf16.msra.mxu0 %v1321
        %1361 = vmatprep.subr.bf16.mxu0 0
        %1362 = vmatpush1.bf16.msra.mxu0 %v1322
        %1363 = vmatprep.subr.bf16.mxu0 0
        %1364 = vmatpush1.bf16.msra.mxu0 %v1323
        %1365 = vmatprep.subr.bf16.mxu0 0
        %1366 = vmatpush1.bf16.msra.mxu0 %v1324
        %1367 = vmatprep.subr.bf16.mxu0 0
        %1368 = vmatpush1.bf16.msra.mxu0 %v1325
        %1369 = vmatprep.subr.bf16.mxu0 0
        %1370 = vmatpush1.bf16.msra.mxu0 %v1326
        %1371 = vmatprep.subr.bf16.mxu0 0
        %1372 = vmatpush1.bf16.msra.mxu0 %v1327
        %1373 = vmatprep.subr.bf16.mxu0 0
        %1374 = vmatpush1.bf16.msra.mxu0 %v1328
        %1375 = vmatprep.subr.bf16.mxu0 0
        %1376 = vmatpush1.bf16.msra.mxu0 %v1329
        %1377 = vmatprep.subr.bf16.mxu0 0
        %1378 = vmatpush1.bf16.msra.mxu0 %v1330
        %1379 = vmatprep.mubr.bf16.mxu0 %v1250
        %1380 = vmatmul.mubr.bf16.gmra.mrb[0].mxu0 %v1249
        %v1381 = vpop.f32.mrb[0].mxu0
        %v1382 = vadd.f32 0.0, %v1381
        %v1383 = vpop.f32.mrb[0].mxu0
        %v1384 = vpop.f32.mrb[0].mxu0
        %v1385 = vpop.f32.mrb[0].mxu0
        %1386 = vdwg.mxu0
        %v1387 = vmul.f32 %v1074, %v1382
        %v1388 = vadd.f32 %v920, %v1387
        %1389 = vst [vmem:[%s5] sm:$0xff] %v1388
        %v1390 = vmul.f32 %v808, %v394
        %v1391 = vmul.f32 %v811, %v665
        %v1392 = vadd.f32 %v1390, %v1391
        %1393 = vst [vmem:[%s383] sm:$0xff] %v1392
        %v1394 = vmul.f32 %v808, %v396
        %v1395 = vadd.f32 %v1394, %v811
        %s1396 = scalar_lea.vmem %s383, 8 [#allocation10]
        %1397 = vst [vmem:[%s1396] sm:$0xff] %v1395
        %s1398 = scalar_lea.vmem %s383, 16 [#allocation10]
        %1399 = vst [vmem:[%s1398] sm:$0xff] %v805
        %s1400 = scalar_lea.vmem %s383, 24 [#allocation10]
        %1401 = vst [vmem:[%s1400] sm:$0xff] %v424
        %s1402 = scalar_lea.vmem %s383, 32 [#allocation10]
        %1403 = vst [vmem:[%s1402] sm:$0xff] %v941
        %s1404 = sand.u32 %s184, 1
        %s1405 = scalar_lea.sflag [#allocation4], %s1404
        %s1406 = sand.u32 %s184, 1
        %s1407 = smul.addr %s1406, 40
        %s1408 = scalar_lea.vmem [#allocation10], %s1407
        // Predicated region
        $region61: #{rwkv_v4_forward.2} parent=39 // pred_check
          %p1409 = pneg %p168
        $region62: #{rwkv_v4_forward.2} parent=39 // pred_check_branch
          %1411 = sbr.rel (%p1409) target = $region64
        $region63: #{rwkv_v4_forward.2} parent=39 // pred_region
          _
        $region64: #{rwkv_v4_forward.2} parent=39 // pred_fallthru
          _
        // Predicated region
        $region65: #{rwkv_v4_forward.2} parent=39 // pred_check
          %p1412 = pneg %p194
        $region66: #{rwkv_v4_forward.2} parent=39 // pred_check_branch
          %1414 = sbr.rel (%p1412) target = $region68
        $region67: #{rwkv_v4_forward.2} parent=39 // pred_region
          %s1416 = ssub.s32 640, 640
          %1417 = vsyncadd %s1405, %s1416
          %s1418 = smul.addr %s30, 128
          %s1419 = scalar_lea.hbm %s6, %s1418
          %s1420 = sshll.u32 %s1408, 4
          %s1421 = int_to_ptr.vmem [resolvable:$true] %s1420
          %1426 = dma.vmem_to_hbm [thread:$0]  %s1421, 640, %s1419, %s1405, 128, 512, 8
        $region68: #{rwkv_v4_forward.2} parent=39 // pred_fallthru
          _
        // Predicated region
        $region69: #{rwkv_v4_forward.2} parent=39 // pred_check
          %p1427 = pneg %p168
        $region70: #{rwkv_v4_forward.2} parent=39 // pred_check_branch
          %1429 = sbr.rel (%p1427) target = $region72
        $region71: #{rwkv_v4_forward.2} parent=39 // pred_region
          _
        $region72: #{rwkv_v4_forward.2} parent=39 // pred_fallthru
          _
      $region40: #{rwkv_v4_forward.2} parent=5 // pred_fallthru
        _
      %p1430 = scmp.le.s32.totalorder 2, %s25
      // Predicated region
      $region73: #{rwkv_v4_forward.2} parent=5 // pred_check
        %p1431 = pneg %p1430
      $region74: #{rwkv_v4_forward.2} parent=5 // pred_check_branch
        %1433 = sbr.rel (%p1431) target = $region76
      $region75: #{rwkv_v4_forward.2} parent=5 // pred_region
        %s1434 = ssub.s32 %s25, 2
        // Predicated region
        $region77: #{rwkv_v4_forward.2} parent=75 // pred_check
          %p1435 = pneg %p200
        $region78: #{rwkv_v4_forward.2} parent=75 // pred_check_branch
          %1437 = sbr.rel (%p1435) target = $region80
        $region79: #{rwkv_v4_forward.2} parent=75 // pred_region
          %s1438 = sand.u32 %s185, 1
          %s1439 = scalar_lea.sflag [#allocation4], %s1438
          %s1440 = sand.u32 %s185, 1
          %s1441 = smul.addr %s1440, 40
          %s1442 = scalar_lea.vmem [#allocation10], %s1441
          %1443 = dma.done %s1439, 640
        $region80: #{rwkv_v4_forward.2} parent=75 // pred_fallthru
          _
      $region76: #{rwkv_v4_forward.2} parent=5 // pred_fallthru
        _
    $region6: #{rwkv_v4_forward.2} parent=1 // loop_footer
      %s29 = sadd.s32 1, %s25
    $region7: #{rwkv_v4_forward.2} parent=1 // loop_footer_branch
      %24 = sbr.rel target = $region3
    $region8: #{rwkv_v4_forward.2} parent=1 // loop_exit
      _
    %1444 = vsyncpa [#allocation3], 1
    %s1445 = scalar_lea.sflag [#allocation3], 1
    %1446 = vsyncpa %s1445, 1
    %1447 = vsyncpa [#allocation6], 1
    %s1448 = scalar_lea.sflag [#allocation6], 1
    %1449 = vsyncpa %s1448, 1
    %1450 = vsyncpa [#allocation9], 1
    %s1451 = scalar_lea.sflag [#allocation9], 1
    %1452 = vsyncpa %s1451, 1
    %1453 = vsyncpa [#allocation4], 1
    %s1454 = scalar_lea.sflag [#allocation4], 1
    %1455 = vsyncpa %s1454, 1

</llo_original>
